<compile_context>
chip_gen: v6e
topology: v6e:2x2x1
jax: 0.10.0
libtpu: 0.0.40
codegen_flags: <defaults>
</compile_context>

<pallas_src>
import functools

import jax
import jax.numpy as jnp
from jax.experimental import pallas as pl
from jax.experimental.pallas import tpu as pltpu

HIDDEN_DIM = 64          # H  (PyTorch hidden_dim)
INPUT_DIM = 1            # D
NUM_CLASSES = 6          # C
NUM_LAYERS = 1           # single layer -> hn[-1] is the final hidden state

HIDDEN_PAD = 128         # HP: each gate block padded to one full 128-lane vreg
CLASSES_PAD = 128        # CP: lane-dense FC output slab
GROUP_ROWS = 128         # rows per independent (h, c) chain (MXU M-fill target)

# Packed gate block order [i, f, o, g] (PyTorch rows are [i, f, g, o]):
# the three sigmoid gates become one contiguous 3*HP-lane slice.
_GATE_PERM = (0, 1, 3, 2)     # new block k  <-  old gate _GATE_PERM[k]


def _round_up(x, m):
    return ((x + m - 1) // m) * m


def _choose_batch_block(batch):
    """Batch rows per grid step (sublane-aligned)."""
    # Whole batch in one block while it fits two interleaved 128-row chains;
    # beyond that, fixed 256-row blocks (2 chains / block) on a parallel grid.
    # TODO(synk): re-derive the block budget per generation at scale
    # (v7x: 64 MiB VMEM / 2 TCs; v6e & v5e: 128 MiB).
    if batch <= 2 * GROUP_ROWS:
        return _round_up(max(batch, 8), 8)
    return 2 * GROUP_ROWS


def _make_lstm_fc_kernel(T, B_blk, HP):
    """Build the kernel for static T / batch-block / padded hidden size."""
    n_groups = max(1, (B_blk + GROUP_ROWS - 1) // GROUP_ROWS)
    bounds = []
    start = 0
    for _ in range(n_groups):
        size = min(GROUP_ROWS, B_blk - start)
        bounds.append((start, size))
        start += size

    def kernel(x_ref, wih_ref, whh_ref, b_ref, wfc_ref, bfc_ref, out_ref):
        # x_ref   : (B_blk, T)   batch rows in sublanes, time in lanes (D==1)
        # wih_ref : (1, 4*HP)    input->gate weights, blocks [i|f|o|g], padded
        # whh_ref : (HP, 4*HP)   hidden->gate weights, zero-padded rows/lanes
        # b_ref   : (1, 4*HP)    combined bias (b_ih + b_hh), padded
        # wfc_ref : (HP, CP)     fc weight (transposed), padded
        # bfc_ref : (1, CP)      fc bias, padded
        # out_ref : (B_blk, CP)  logits; only the first NUM_CLASSES lanes valid
        whh = whh_ref[...]                     # loop-invariant stationary RHS
        wih = wih_ref[...]
        bias = b_ref[...]

        def step(xg_t, h, c):
            # xg_t is independent of h -> its broadcast/VPU work is hidden
            # behind the in-flight MXU push of the previous step.
            gates = jnp.dot(h, whh, preferred_element_type=jnp.float32) + xg_t
            sig = jax.nn.sigmoid(gates[:, 0:3 * HP])      # one EUP stream: i|f|o
            i = sig[:, 0 * HP:1 * HP]
            f = sig[:, 1 * HP:2 * HP]
            o = sig[:, 2 * HP:3 * HP]
            g = jnp.tanh(gates[:, 3 * HP:4 * HP])
            c = f * c + i * g
            h = o * jnp.tanh(c)
            # Padded lanes stay exactly 0: preact_pad = 0 -> g_pad = 0,
            # c_pad = sig(0)*0 + sig(0)*0 = 0, h_pad = sig(0)*tanh(0) = 0.
            return h, c

        hs = [jnp.zeros((sz, HP), jnp.float32) for _, sz in bounds]
        cs = [jnp.zeros((sz, HP), jnp.float32) for _, sz in bounds]

        if T <= 16:
            # Small static T: full unroll; independent groups interleaved so
            # the scheduler overlaps MXU pushes with EUP/VPU work.
            for t in range(T):
                for gi, (s, sz) in enumerate(bounds):
                    xg_t = x_ref[s:s + sz, t:t + 1] * wih + bias
                    hs[gi], cs[gi] = step(xg_t, hs[gi], cs[gi])
        else:
            # Larger T: bound live ranges / code size with a partially
            # unrolled fori_loop (h, c carried as values).
            def body(t, carry):
                hs_c, cs_c = carry
                new_h, new_c = [], []
                for gi, (s, sz) in enumerate(bounds):
                    xg_t = x_ref[s:s + sz, pl.ds(t, 1)] * wih + bias
                    h_n, c_n = step(xg_t, hs_c[gi], cs_c[gi])
                    new_h.append(h_n)
                    new_c.append(c_n)
                return tuple(new_h), tuple(new_c)

            hs_t, cs_t = jax.lax.fori_loop(0, T, body,
                                           (tuple(hs), tuple(cs)),
                                           unroll=min(8, T))
            hs = list(hs_t)

        # fc(hn[-1]) into a lane-dense slab; wrapper slices to NUM_CLASSES.
        wfc = wfc_ref[...]
        bfc = bfc_ref[...]
        for gi, (s, sz) in enumerate(bounds):
            out_ref[s:s + sz, :] = (
                jnp.dot(hs[gi], wfc, preferred_element_type=jnp.float32) + bfc)

    return kernel


@jax.jit
def lstm_classifier_forward(x, packed):
    """x: (B, T, D=1) float32, batch-first like the PyTorch module."""
    B, T, D = x.shape
    assert D == INPUT_DIM
    HP = packed["w_hh"].shape[0]
    CP = packed["w_fc"].shape[1]

    B_blk = _choose_batch_block(B)
    B_pad = _round_up(max(B, B_blk), B_blk)
    n_blocks = B_pad // B_blk

    # (B_pad, T): batch rows in sublanes, time in lanes; zero-pad extra rows.
    x_bt = jnp.zeros((B_pad, T), jnp.float32).at[:B, :].set(x[:, :, 0])

    kernel = _make_lstm_fc_kernel(T, B_blk, HP)

    flops = 2 * T * B_pad * 4 * HP * (1 + HP) + 2 * B_pad * HP * CP
    transcendentals = 5 * T * B_pad * HP
    bytes_accessed = 4 * (B_pad * T + 4 * HP + HP * 4 * HP + 4 * HP
                          + HP * CP + CP + B_pad * CP)

    grid_spec = pltpu.PrefetchScalarGridSpec(
        num_scalar_prefetch=0,
        grid=(n_blocks,),
        in_specs=[
            pl.BlockSpec((B_blk, T), lambda i: (i, 0)),       # x (batch-blocked)
            pl.BlockSpec((1, 4 * HP), lambda i: (0, 0)),      # w_ih (resident)
            pl.BlockSpec((HP, 4 * HP), lambda i: (0, 0)),     # w_hh (resident)
            pl.BlockSpec((1, 4 * HP), lambda i: (0, 0)),      # bias (resident)
            pl.BlockSpec((HP, CP), lambda i: (0, 0)),         # w_fc (resident)
            pl.BlockSpec((1, CP), lambda i: (0, 0)),          # b_fc (resident)
        ],
        out_specs=pl.BlockSpec((B_blk, CP), lambda i: (i, 0)),
    )

    out_padded = pl.pallas_call(
        kernel,
        out_shape=jax.ShapeDtypeStruct((B_pad, CP), jnp.float32),
        grid_spec=grid_spec,
        compiler_params=pltpu.CompilerParams(
            dimension_semantics=("parallel",)),     # 2 TCs on v7x when >1 block
        cost_estimate=pl.CostEstimate(flops=flops,
                                      transcendentals=transcendentals,
                                      bytes_accessed=bytes_accessed),
    )(x_bt, packed["w_ih"], packed["w_hh"], packed["b"],
      packed["w_fc"], packed["b_fc"])

    return out_padded[:B, :NUM_CLASSES]


def init_params(key, input_dim=INPUT_DIM, hidden_dim=HIDDEN_DIM,
                num_classes=NUM_CLASSES):
    """PyTorch-layout params, U(-1/sqrt(H), 1/sqrt(H)) like nn.LSTM / nn.Linear."""
    k = 1.0 / float(hidden_dim) ** 0.5
    keys = jax.random.split(key, 6)

    def u(kk, shape):
        return jax.random.uniform(kk, shape, jnp.float32, -k, k)

    return {
        "weight_ih": u(keys[0], (4 * hidden_dim, input_dim)),   # weight_ih_l0
        "weight_hh": u(keys[1], (4 * hidden_dim, hidden_dim)),  # weight_hh_l0
        "bias_ih":   u(keys[2], (4 * hidden_dim,)),
        "bias_hh":   u(keys[3], (4 * hidden_dim,)),
        "fc_weight": u(keys[4], (num_classes, hidden_dim)),     # nn.Linear
        "fc_bias":   u(keys[5], (num_classes,)),
    }


def pack_params(raw, hp=HIDDEN_PAD, cp=CLASSES_PAD):
    """Pad/transpose PyTorch-layout params: gate blocks reordered to
    [i, f, o, g] and each padded to 128 lanes."""
    H, C = HIDDEN_DIM, NUM_CLASSES
    perm = list(_GATE_PERM)

    def pad_gate_vec(v):                       # (4H,) -> (4*hp,), reordered
        g = v.reshape(4, H)[perm, :]
        return jnp.pad(g, ((0, 0), (0, hp - H))).reshape(4 * hp)

    w_ih_p = pad_gate_vec(raw["weight_ih"][:, 0])[None, :]          # (1, 4*hp)
    b_p = pad_gate_vec(raw["bias_ih"] + raw["bias_hh"])[None, :]    # (1, 4*hp)

    whh_g = raw["weight_hh"].reshape(4, H, H)[perm, :, :]           # [k', j, r]
    whh_t = jnp.transpose(whh_g, (2, 0, 1))                         # [r, k', j]
    whh_t = jnp.pad(whh_t, ((0, hp - H), (0, 0), (0, hp - H)))      # (hp, 4, hp)
    w_hh_p = whh_t.reshape(hp, 4 * hp)                              # (hp, 4*hp)

    w_fc_p = jnp.zeros((hp, cp), jnp.float32).at[:H, :C].set(raw["fc_weight"].T)
    b_fc_p = jnp.zeros((1, cp), jnp.float32).at[0, :C].set(raw["fc_bias"])

    return {"w_ih": w_ih_p, "w_hh": w_hh_p, "b": b_p,
            "w_fc": w_fc_p, "b_fc": b_fc_p}


def reference_forward(x, raw):
    """Pure-JAX reference with identical semantics (unpadded, PyTorch order)."""
    B, T, _ = x.shape
    H = HIDDEN_DIM
    w_ih = raw["weight_ih"][:, 0]                 # (4H,)
    w_hh = raw["weight_hh"]                       # (4H, H)
    b = raw["bias_ih"] + raw["bias_hh"]           # (4H,)
    h = jnp.zeros((B, H), jnp.float32)
    c = jnp.zeros((B, H), jnp.float32)
    for t in range(T):
        gates = x[:, t, :] * w_ih[None, :] + h @ w_hh.T + b[None, :]
        i = jax.nn.sigmoid(gates[:, 0 * H:1 * H])
        f = jax.nn.sigmoid(gates[:, 1 * H:2 * H])
        g = jnp.tanh(gates[:, 2 * H:3 * H])
        o = jax.nn.sigmoid(gates[:, 3 * H:4 * H])
        c = f * c + i * g
        h = o * jnp.tanh(c)
    return h @ raw["fc_weight"].T + raw["fc_bias"][None, :]


if __name__ == "__main__":
    key = jax.random.PRNGKey(0)
    k_x, k_p = jax.random.split(key)

    B, T = 2, 8  # small batch / sequence length
    x = jax.random.normal(k_x, (B, T, INPUT_DIM), jnp.float32)
    raw = init_params(k_p)
    packed = pack_params(raw)

    out = lstm_classifier_forward(x, packed)
    out = jax.block_until_ready(out)

    ref = reference_forward(x, raw)
    assert out.shape == (B, NUM_CLASSES)
    assert jnp.allclose(out, ref, atol=2e-3, rtol=2e-3), (
        float(jnp.max(jnp.abs(out - ref))))

    print("KERNEL_OK")
</pallas_src>

<mosaic_0001>
module attributes {stable_mosaic.version = 11 : i64} {
  func.func @kernel(%arg0: i32, %arg1: memref<8x8xf32, #tpu.memory_space<vmem>>, %arg2: memref<1x512xf32, #tpu.memory_space<vmem>>, %arg3: memref<128x512xf32, #tpu.memory_space<vmem>>, %arg4: memref<1x512xf32, #tpu.memory_space<vmem>>, %arg5: memref<128x128xf32, #tpu.memory_space<vmem>>, %arg6: memref<1x128xf32, #tpu.memory_space<vmem>>, %arg7: memref<8x128xf32, #tpu.memory_space<vmem>>) attributes {dimension_semantics = [#tpu.dimension_semantics<parallel>], iteration_bounds = array<i64: 1>, scalar_prefetch = 0 : i64, scratch_operands = 0 : i64, tpu.core_type = #tpu.core_type<tc>, window_params = [{transform_indices = @transform_0, window_bounds = array<i64: 8, 8>}, {pipeline_mode = #tpu.pipeline_mode<synchronous>, transform_indices = @transform_1, window_bounds = array<i64: 1, 512>}, {pipeline_mode = #tpu.pipeline_mode<synchronous>, transform_indices = @transform_2, window_bounds = array<i64: 128, 512>}, {pipeline_mode = #tpu.pipeline_mode<synchronous>, transform_indices = @transform_3, window_bounds = array<i64: 1, 512>}, {pipeline_mode = #tpu.pipeline_mode<synchronous>, transform_indices = @transform_4, window_bounds = array<i64: 128, 128>}, {pipeline_mode = #tpu.pipeline_mode<synchronous>, transform_indices = @transform_5, window_bounds = array<i64: 1, 128>}, {transform_indices = @transform_6, window_bounds = array<i64: 8, 128>}]} {
    %c0 = arith.constant 0 : index
    %c0_0 = arith.constant 0 : index
    %0 = vector.load %arg3[%c0, %c0_0] : memref<128x512xf32, #tpu.memory_space<vmem>>, vector<128x512xf32>
    %c0_1 = arith.constant 0 : index
    %c0_2 = arith.constant 0 : index
    %1 = vector.load %arg2[%c0_1, %c0_2] : memref<1x512xf32, #tpu.memory_space<vmem>>, vector<1x512xf32>
    %c0_3 = arith.constant 0 : index
    %c0_4 = arith.constant 0 : index
    %2 = vector.load %arg4[%c0_3, %c0_4] : memref<1x512xf32, #tpu.memory_space<vmem>>, vector<1x512xf32>
    %cst = arith.constant 0.000000e+00 : f32
    %3 = vector.broadcast %cst : f32 to vector<8x128xf32>
    %cst_5 = arith.constant 0.000000e+00 : f32
    %4 = vector.broadcast %cst_5 : f32 to vector<8x128xf32>
    %c0_6 = arith.constant 0 : index
    %c0_7 = arith.constant 0 : index
    %5 = vector.load %arg1[%c0_6, %c0_7] : memref<8x8xf32, #tpu.memory_space<vmem>>, vector<8x1xf32>
    %6 = vector.broadcast %5 : vector<8x1xf32> to vector<8x512xf32>
    %7 = vector.broadcast %1 : vector<1x512xf32> to vector<8x512xf32>
    %8 = arith.mulf %6, %7 : vector<8x512xf32>
    %9 = vector.broadcast %2 : vector<1x512xf32> to vector<8x512xf32>
    %10 = arith.addf %8, %9 : vector<8x512xf32>
    %cst_8 = arith.constant dense<0.000000e+00> : vector<8x512xf32>
    %11 = tpu.matmul %3, %0, %cst_8 {dimension_numbers = #tpu.dot_dimension_numbers<[1], [0], [0], [1], [0, 0, 1, 1], [], []>} : vector<8x128xf32>, vector<128x512xf32>, vector<8x512xf32> -> vector<8x512xf32>
    %12 = arith.addf %11, %10 : vector<8x512xf32>
    %13 = vector.extract_strided_slice %12 {offsets = [0, 0], sizes = [8, 384], strides = [1, 1]} : vector<8x512xf32> to vector<8x384xf32>
    %14 = arith.negf %13 : vector<8x384xf32>
    %15 = math.exp %14 : vector<8x384xf32>
    %cst_9 = arith.constant 1.000000e+00 : f32
    %16 = vector.broadcast %cst_9 : f32 to vector<8x384xf32>
    %17 = arith.addf %16, %15 : vector<8x384xf32>
    %18 = arith.divf %16, %17 : vector<8x384xf32>
    %19 = vector.extract_strided_slice %18 {offsets = [0, 0], sizes = [8, 128], strides = [1, 1]} : vector<8x384xf32> to vector<8x128xf32>
    %20 = vector.extract_strided_slice %18 {offsets = [0, 128], sizes = [8, 128], strides = [1, 1]} : vector<8x384xf32> to vector<8x128xf32>
    %21 = vector.extract_strided_slice %18 {offsets = [0, 256], sizes = [8, 128], strides = [1, 1]} : vector<8x384xf32> to vector<8x128xf32>
    %22 = vector.extract_strided_slice %12 {offsets = [0, 384], sizes = [8, 128], strides = [1, 1]} : vector<8x512xf32> to vector<8x128xf32>
    %23 = math.tanh %22 : vector<8x128xf32>
    %24 = arith.mulf %20, %4 : vector<8x128xf32>
    %25 = arith.mulf %19, %23 : vector<8x128xf32>
    %26 = arith.addf %24, %25 : vector<8x128xf32>
    %27 = math.tanh %26 : vector<8x128xf32>
    %28 = arith.mulf %21, %27 : vector<8x128xf32>
    %c0_10 = arith.constant 0 : index
    %c1 = arith.constant 1 : index
    %29 = vector.load %arg1[%c0_10, %c1] : memref<8x8xf32, #tpu.memory_space<vmem>>, vector<8x1xf32>
    %30 = vector.broadcast %29 : vector<8x1xf32> to vector<8x512xf32>
    %31 = vector.broadcast %1 : vector<1x512xf32> to vector<8x512xf32>
    %32 = arith.mulf %30, %31 : vector<8x512xf32>
    %33 = vector.broadcast %2 : vector<1x512xf32> to vector<8x512xf32>
    %34 = arith.addf %32, %33 : vector<8x512xf32>
    %cst_11 = arith.constant dense<0.000000e+00> : vector<8x512xf32>
    %35 = tpu.matmul %28, %0, %cst_11 {dimension_numbers = #tpu.dot_dimension_numbers<[1], [0], [0], [1], [0, 0, 1, 1], [], []>} : vector<8x128xf32>, vector<128x512xf32>, vector<8x512xf32> -> vector<8x512xf32>
    %36 = arith.addf %35, %34 : vector<8x512xf32>
    %37 = vector.extract_strided_slice %36 {offsets = [0, 0], sizes = [8, 384], strides = [1, 1]} : vector<8x512xf32> to vector<8x384xf32>
    %38 = arith.negf %37 : vector<8x384xf32>
    %39 = math.exp %38 : vector<8x384xf32>
    %cst_12 = arith.constant 1.000000e+00 : f32
    %40 = vector.broadcast %cst_12 : f32 to vector<8x384xf32>
    %41 = arith.addf %40, %39 : vector<8x384xf32>
    %42 = arith.divf %40, %41 : vector<8x384xf32>
    %43 = vector.extract_strided_slice %42 {offsets = [0, 0], sizes = [8, 128], strides = [1, 1]} : vector<8x384xf32> to vector<8x128xf32>
    %44 = vector.extract_strided_slice %42 {offsets = [0, 128], sizes = [8, 128], strides = [1, 1]} : vector<8x384xf32> to vector<8x128xf32>
    %45 = vector.extract_strided_slice %42 {offsets = [0, 256], sizes = [8, 128], strides = [1, 1]} : vector<8x384xf32> to vector<8x128xf32>
    %46 = vector.extract_strided_slice %36 {offsets = [0, 384], sizes = [8, 128], strides = [1, 1]} : vector<8x512xf32> to vector<8x128xf32>
    %47 = math.tanh %46 : vector<8x128xf32>
    %48 = arith.mulf %44, %26 : vector<8x128xf32>
    %49 = arith.mulf %43, %47 : vector<8x128xf32>
    %50 = arith.addf %48, %49 : vector<8x128xf32>
    %51 = math.tanh %50 : vector<8x128xf32>
    %52 = arith.mulf %45, %51 : vector<8x128xf32>
    %c0_13 = arith.constant 0 : index
    %c2 = arith.constant 2 : index
    %53 = vector.load %arg1[%c0_13, %c2] : memref<8x8xf32, #tpu.memory_space<vmem>>, vector<8x1xf32>
    %54 = vector.broadcast %53 : vector<8x1xf32> to vector<8x512xf32>
    %55 = vector.broadcast %1 : vector<1x512xf32> to vector<8x512xf32>
    %56 = arith.mulf %54, %55 : vector<8x512xf32>
    %57 = vector.broadcast %2 : vector<1x512xf32> to vector<8x512xf32>
    %58 = arith.addf %56, %57 : vector<8x512xf32>
    %cst_14 = arith.constant dense<0.000000e+00> : vector<8x512xf32>
    %59 = tpu.matmul %52, %0, %cst_14 {dimension_numbers = #tpu.dot_dimension_numbers<[1], [0], [0], [1], [0, 0, 1, 1], [], []>} : vector<8x128xf32>, vector<128x512xf32>, vector<8x512xf32> -> vector<8x512xf32>
    %60 = arith.addf %59, %58 : vector<8x512xf32>
    %61 = vector.extract_strided_slice %60 {offsets = [0, 0], sizes = [8, 384], strides = [1, 1]} : vector<8x512xf32> to vector<8x384xf32>
    %62 = arith.negf %61 : vector<8x384xf32>
    %63 = math.exp %62 : vector<8x384xf32>
    %cst_15 = arith.constant 1.000000e+00 : f32
    %64 = vector.broadcast %cst_15 : f32 to vector<8x384xf32>
    %65 = arith.addf %64, %63 : vector<8x384xf32>
    %66 = arith.divf %64, %65 : vector<8x384xf32>
    %67 = vector.extract_strided_slice %66 {offsets = [0, 0], sizes = [8, 128], strides = [1, 1]} : vector<8x384xf32> to vector<8x128xf32>
    %68 = vector.extract_strided_slice %66 {offsets = [0, 128], sizes = [8, 128], strides = [1, 1]} : vector<8x384xf32> to vector<8x128xf32>
    %69 = vector.extract_strided_slice %66 {offsets = [0, 256], sizes = [8, 128], strides = [1, 1]} : vector<8x384xf32> to vector<8x128xf32>
    %70 = vector.extract_strided_slice %60 {offsets = [0, 384], sizes = [8, 128], strides = [1, 1]} : vector<8x512xf32> to vector<8x128xf32>
    %71 = math.tanh %70 : vector<8x128xf32>
    %72 = arith.mulf %68, %50 : vector<8x128xf32>
    %73 = arith.mulf %67, %71 : vector<8x128xf32>
    %74 = arith.addf %72, %73 : vector<8x128xf32>
    %75 = math.tanh %74 : vector<8x128xf32>
    %76 = arith.mulf %69, %75 : vector<8x128xf32>
    %c0_16 = arith.constant 0 : index
    %c3 = arith.constant 3 : index
    %77 = vector.load %arg1[%c0_16, %c3] : memref<8x8xf32, #tpu.memory_space<vmem>>, vector<8x1xf32>
    %78 = vector.broadcast %77 : vector<8x1xf32> to vector<8x512xf32>
    %79 = vector.broadcast %1 : vector<1x512xf32> to vector<8x512xf32>
    %80 = arith.mulf %78, %79 : vector<8x512xf32>
    %81 = vector.broadcast %2 : vector<1x512xf32> to vector<8x512xf32>
    %82 = arith.addf %80, %81 : vector<8x512xf32>
    %cst_17 = arith.constant dense<0.000000e+00> : vector<8x512xf32>
    %83 = tpu.matmul %76, %0, %cst_17 {dimension_numbers = #tpu.dot_dimension_numbers<[1], [0], [0], [1], [0, 0, 1, 1], [], []>} : vector<8x128xf32>, vector<128x512xf32>, vector<8x512xf32> -> vector<8x512xf32>
    %84 = arith.addf %83, %82 : vector<8x512xf32>
    %85 = vector.extract_strided_slice %84 {offsets = [0, 0], sizes = [8, 384], strides = [1, 1]} : vector<8x512xf32> to vector<8x384xf32>
    %86 = arith.negf %85 : vector<8x384xf32>
    %87 = math.exp %86 : vector<8x384xf32>
    %cst_18 = arith.constant 1.000000e+00 : f32
    %88 = vector.broadcast %cst_18 : f32 to vector<8x384xf32>
    %89 = arith.addf %88, %87 : vector<8x384xf32>
    %90 = arith.divf %88, %89 : vector<8x384xf32>
    %91 = vector.extract_strided_slice %90 {offsets = [0, 0], sizes = [8, 128], strides = [1, 1]} : vector<8x384xf32> to vector<8x128xf32>
    %92 = vector.extract_strided_slice %90 {offsets = [0, 128], sizes = [8, 128], strides = [1, 1]} : vector<8x384xf32> to vector<8x128xf32>
    %93 = vector.extract_strided_slice %90 {offsets = [0, 256], sizes = [8, 128], strides = [1, 1]} : vector<8x384xf32> to vector<8x128xf32>
    %94 = vector.extract_strided_slice %84 {offsets = [0, 384], sizes = [8, 128], strides = [1, 1]} : vector<8x512xf32> to vector<8x128xf32>
    %95 = math.tanh %94 : vector<8x128xf32>
    %96 = arith.mulf %92, %74 : vector<8x128xf32>
    %97 = arith.mulf %91, %95 : vector<8x128xf32>
    %98 = arith.addf %96, %97 : vector<8x128xf32>
    %99 = math.tanh %98 : vector<8x128xf32>
    %100 = arith.mulf %93, %99 : vector<8x128xf32>
    %c0_19 = arith.constant 0 : index
    %c4 = arith.constant 4 : index
    %101 = vector.load %arg1[%c0_19, %c4] : memref<8x8xf32, #tpu.memory_space<vmem>>, vector<8x1xf32>
    %102 = vector.broadcast %101 : vector<8x1xf32> to vector<8x512xf32>
    %103 = vector.broadcast %1 : vector<1x512xf32> to vector<8x512xf32>
    %104 = arith.mulf %102, %103 : vector<8x512xf32>
    %105 = vector.broadcast %2 : vector<1x512xf32> to vector<8x512xf32>
    %106 = arith.addf %104, %105 : vector<8x512xf32>
    %cst_20 = arith.constant dense<0.000000e+00> : vector<8x512xf32>
    %107 = tpu.matmul %100, %0, %cst_20 {dimension_numbers = #tpu.dot_dimension_numbers<[1], [0], [0], [1], [0, 0, 1, 1], [], []>} : vector<8x128xf32>, vector<128x512xf32>, vector<8x512xf32> -> vector<8x512xf32>
    %108 = arith.addf %107, %106 : vector<8x512xf32>
    %109 = vector.extract_strided_slice %108 {offsets = [0, 0], sizes = [8, 384], strides = [1, 1]} : vector<8x512xf32> to vector<8x384xf32>
    %110 = arith.negf %109 : vector<8x384xf32>
    %111 = math.exp %110 : vector<8x384xf32>
    %cst_21 = arith.constant 1.000000e+00 : f32
    %112 = vector.broadcast %cst_21 : f32 to vector<8x384xf32>
    %113 = arith.addf %112, %111 : vector<8x384xf32>
    %114 = arith.divf %112, %113 : vector<8x384xf32>
    %115 = vector.extract_strided_slice %114 {offsets = [0, 0], sizes = [8, 128], strides = [1, 1]} : vector<8x384xf32> to vector<8x128xf32>
    %116 = vector.extract_strided_slice %114 {offsets = [0, 128], sizes = [8, 128], strides = [1, 1]} : vector<8x384xf32> to vector<8x128xf32>
    %117 = vector.extract_strided_slice %114 {offsets = [0, 256], sizes = [8, 128], strides = [1, 1]} : vector<8x384xf32> to vector<8x128xf32>
    %118 = vector.extract_strided_slice %108 {offsets = [0, 384], sizes = [8, 128], strides = [1, 1]} : vector<8x512xf32> to vector<8x128xf32>
    %119 = math.tanh %118 : vector<8x128xf32>
    %120 = arith.mulf %116, %98 : vector<8x128xf32>
    %121 = arith.mulf %115, %119 : vector<8x128xf32>
    %122 = arith.addf %120, %121 : vector<8x128xf32>
    %123 = math.tanh %122 : vector<8x128xf32>
    %124 = arith.mulf %117, %123 : vector<8x128xf32>
    %c0_22 = arith.constant 0 : index
    %c5 = arith.constant 5 : index
    %125 = vector.load %arg1[%c0_22, %c5] : memref<8x8xf32, #tpu.memory_space<vmem>>, vector<8x1xf32>
    %126 = vector.broadcast %125 : vector<8x1xf32> to vector<8x512xf32>
    %127 = vector.broadcast %1 : vector<1x512xf32> to vector<8x512xf32>
    %128 = arith.mulf %126, %127 : vector<8x512xf32>
    %129 = vector.broadcast %2 : vector<1x512xf32> to vector<8x512xf32>
    %130 = arith.addf %128, %129 : vector<8x512xf32>
    %cst_23 = arith.constant dense<0.000000e+00> : vector<8x512xf32>
    %131 = tpu.matmul %124, %0, %cst_23 {dimension_numbers = #tpu.dot_dimension_numbers<[1], [0], [0], [1], [0, 0, 1, 1], [], []>} : vector<8x128xf32>, vector<128x512xf32>, vector<8x512xf32> -> vector<8x512xf32>
    %132 = arith.addf %131, %130 : vector<8x512xf32>
    %133 = vector.extract_strided_slice %132 {offsets = [0, 0], sizes = [8, 384], strides = [1, 1]} : vector<8x512xf32> to vector<8x384xf32>
    %134 = arith.negf %133 : vector<8x384xf32>
    %135 = math.exp %134 : vector<8x384xf32>
    %cst_24 = arith.constant 1.000000e+00 : f32
    %136 = vector.broadcast %cst_24 : f32 to vector<8x384xf32>
    %137 = arith.addf %136, %135 : vector<8x384xf32>
    %138 = arith.divf %136, %137 : vector<8x384xf32>
    %139 = vector.extract_strided_slice %138 {offsets = [0, 0], sizes = [8, 128], strides = [1, 1]} : vector<8x384xf32> to vector<8x128xf32>
    %140 = vector.extract_strided_slice %138 {offsets = [0, 128], sizes = [8, 128], strides = [1, 1]} : vector<8x384xf32> to vector<8x128xf32>
    %141 = vector.extract_strided_slice %138 {offsets = [0, 256], sizes = [8, 128], strides = [1, 1]} : vector<8x384xf32> to vector<8x128xf32>
    %142 = vector.extract_strided_slice %132 {offsets = [0, 384], sizes = [8, 128], strides = [1, 1]} : vector<8x512xf32> to vector<8x128xf32>
    %143 = math.tanh %142 : vector<8x128xf32>
    %144 = arith.mulf %140, %122 : vector<8x128xf32>
    %145 = arith.mulf %139, %143 : vector<8x128xf32>
    %146 = arith.addf %144, %145 : vector<8x128xf32>
    %147 = math.tanh %146 : vector<8x128xf32>
    %148 = arith.mulf %141, %147 : vector<8x128xf32>
    %c0_25 = arith.constant 0 : index
    %c6 = arith.constant 6 : index
    %149 = vector.load %arg1[%c0_25, %c6] : memref<8x8xf32, #tpu.memory_space<vmem>>, vector<8x1xf32>
    %150 = vector.broadcast %149 : vector<8x1xf32> to vector<8x512xf32>
    %151 = vector.broadcast %1 : vector<1x512xf32> to vector<8x512xf32>
    %152 = arith.mulf %150, %151 : vector<8x512xf32>
    %153 = vector.broadcast %2 : vector<1x512xf32> to vector<8x512xf32>
    %154 = arith.addf %152, %153 : vector<8x512xf32>
    %cst_26 = arith.constant dense<0.000000e+00> : vector<8x512xf32>
    %155 = tpu.matmul %148, %0, %cst_26 {dimension_numbers = #tpu.dot_dimension_numbers<[1], [0], [0], [1], [0, 0, 1, 1], [], []>} : vector<8x128xf32>, vector<128x512xf32>, vector<8x512xf32> -> vector<8x512xf32>
    %156 = arith.addf %155, %154 : vector<8x512xf32>
    %157 = vector.extract_strided_slice %156 {offsets = [0, 0], sizes = [8, 384], strides = [1, 1]} : vector<8x512xf32> to vector<8x384xf32>
    %158 = arith.negf %157 : vector<8x384xf32>
    %159 = math.exp %158 : vector<8x384xf32>
    %cst_27 = arith.constant 1.000000e+00 : f32
    %160 = vector.broadcast %cst_27 : f32 to vector<8x384xf32>
    %161 = arith.addf %160, %159 : vector<8x384xf32>
    %162 = arith.divf %160, %161 : vector<8x384xf32>
    %163 = vector.extract_strided_slice %162 {offsets = [0, 0], sizes = [8, 128], strides = [1, 1]} : vector<8x384xf32> to vector<8x128xf32>
    %164 = vector.extract_strided_slice %162 {offsets = [0, 128], sizes = [8, 128], strides = [1, 1]} : vector<8x384xf32> to vector<8x128xf32>
    %165 = vector.extract_strided_slice %162 {offsets = [0, 256], sizes = [8, 128], strides = [1, 1]} : vector<8x384xf32> to vector<8x128xf32>
    %166 = vector.extract_strided_slice %156 {offsets = [0, 384], sizes = [8, 128], strides = [1, 1]} : vector<8x512xf32> to vector<8x128xf32>
    %167 = math.tanh %166 : vector<8x128xf32>
    %168 = arith.mulf %164, %146 : vector<8x128xf32>
    %169 = arith.mulf %163, %167 : vector<8x128xf32>
    %170 = arith.addf %168, %169 : vector<8x128xf32>
    %171 = math.tanh %170 : vector<8x128xf32>
    %172 = arith.mulf %165, %171 : vector<8x128xf32>
    %c0_28 = arith.constant 0 : index
    %c7 = arith.constant 7 : index
    %173 = vector.load %arg1[%c0_28, %c7] : memref<8x8xf32, #tpu.memory_space<vmem>>, vector<8x1xf32>
    %174 = vector.broadcast %173 : vector<8x1xf32> to vector<8x512xf32>
    %175 = vector.broadcast %1 : vector<1x512xf32> to vector<8x512xf32>
    %176 = arith.mulf %174, %175 : vector<8x512xf32>
    %177 = vector.broadcast %2 : vector<1x512xf32> to vector<8x512xf32>
    %178 = arith.addf %176, %177 : vector<8x512xf32>
    %cst_29 = arith.constant dense<0.000000e+00> : vector<8x512xf32>
    %179 = tpu.matmul %172, %0, %cst_29 {dimension_numbers = #tpu.dot_dimension_numbers<[1], [0], [0], [1], [0, 0, 1, 1], [], []>} : vector<8x128xf32>, vector<128x512xf32>, vector<8x512xf32> -> vector<8x512xf32>
    %180 = arith.addf %179, %178 : vector<8x512xf32>
    %181 = vector.extract_strided_slice %180 {offsets = [0, 0], sizes = [8, 384], strides = [1, 1]} : vector<8x512xf32> to vector<8x384xf32>
    %182 = arith.negf %181 : vector<8x384xf32>
    %183 = math.exp %182 : vector<8x384xf32>
    %cst_30 = arith.constant 1.000000e+00 : f32
    %184 = vector.broadcast %cst_30 : f32 to vector<8x384xf32>
    %185 = arith.addf %184, %183 : vector<8x384xf32>
    %186 = arith.divf %184, %185 : vector<8x384xf32>
    %187 = vector.extract_strided_slice %186 {offsets = [0, 0], sizes = [8, 128], strides = [1, 1]} : vector<8x384xf32> to vector<8x128xf32>
    %188 = vector.extract_strided_slice %186 {offsets = [0, 128], sizes = [8, 128], strides = [1, 1]} : vector<8x384xf32> to vector<8x128xf32>
    %189 = vector.extract_strided_slice %186 {offsets = [0, 256], sizes = [8, 128], strides = [1, 1]} : vector<8x384xf32> to vector<8x128xf32>
    %190 = vector.extract_strided_slice %180 {offsets = [0, 384], sizes = [8, 128], strides = [1, 1]} : vector<8x512xf32> to vector<8x128xf32>
    %191 = math.tanh %190 : vector<8x128xf32>
    %192 = arith.mulf %188, %170 : vector<8x128xf32>
    %193 = arith.mulf %187, %191 : vector<8x128xf32>
    %194 = arith.addf %192, %193 : vector<8x128xf32>
    %195 = math.tanh %194 : vector<8x128xf32>
    %196 = arith.mulf %189, %195 : vector<8x128xf32>
    %c0_31 = arith.constant 0 : index
    %c0_32 = arith.constant 0 : index
    %197 = vector.load %arg5[%c0_31, %c0_32] : memref<128x128xf32, #tpu.memory_space<vmem>>, vector<128x128xf32>
    %c0_33 = arith.constant 0 : index
    %c0_34 = arith.constant 0 : index
    %198 = vector.load %arg6[%c0_33, %c0_34] : memref<1x128xf32, #tpu.memory_space<vmem>>, vector<1x128xf32>
    %cst_35 = arith.constant dense<0.000000e+00> : vector<8x128xf32>
    %199 = tpu.matmul %196, %197, %cst_35 {dimension_numbers = #tpu.dot_dimension_numbers<[1], [0], [0], [1], [0, 0, 1, 1], [], []>} : vector<8x128xf32>, vector<128x128xf32>, vector<8x128xf32> -> vector<8x128xf32>
    %200 = vector.broadcast %198 : vector<1x128xf32> to vector<8x128xf32>
    %201 = arith.addf %199, %200 : vector<8x128xf32>
    %c0_36 = arith.constant 0 : index
    %c0_37 = arith.constant 0 : index
    %202 = vector.load %arg7[%c0_36, %c0_37] : memref<8x128xf32, #tpu.memory_space<vmem>>, vector<8x128xf32>
    tpu.vector_store %arg7[%c0_36, %c0_37], %201 {strides = array<i32>} : memref<8x128xf32, #tpu.memory_space<vmem>>, vector<8x128xf32>,
    return
  }
  func.func @transform_0(%arg0: i32) -> (i32, i32) {
    %c0_i32 = arith.constant 0 : i32
    %c0_i32_0 = arith.constant 0 : i32
    return %arg0, %c0_i32 : i32, i32
  }
  func.func @transform_1(%arg0: i32) -> (i32, i32) {
    %c0_i32 = arith.constant 0 : i32
    %c0_i32_0 = arith.constant 0 : i32
    %c0_i32_1 = arith.constant 0 : i32
    return %c0_i32, %c0_i32_0 : i32, i32
  }
  func.func @transform_2(%arg0: i32) -> (i32, i32) {
    %c0_i32 = arith.constant 0 : i32
    %c0_i32_0 = arith.constant 0 : i32
    %c0_i32_1 = arith.constant 0 : i32
    return %c0_i32, %c0_i32_0 : i32, i32
  }
  func.func @transform_3(%arg0: i32) -> (i32, i32) {
    %c0_i32 = arith.constant 0 : i32
    %c0_i32_0 = arith.constant 0 : i32
    %c0_i32_1 = arith.constant 0 : i32
    return %c0_i32, %c0_i32_0 : i32, i32
  }
  func.func @transform_4(%arg0: i32) -> (i32, i32) {
    %c0_i32 = arith.constant 0 : i32
    %c0_i32_0 = arith.constant 0 : i32
    %c0_i32_1 = arith.constant 0 : i32
    return %c0_i32, %c0_i32_0 : i32, i32
  }
  func.func @transform_5(%arg0: i32) -> (i32, i32) {
    %c0_i32 = arith.constant 0 : i32
    %c0_i32_0 = arith.constant 0 : i32
    %c0_i32_1 = arith.constant 0 : i32
    return %c0_i32, %c0_i32_0 : i32, i32
  }
  func.func @transform_6(%arg0: i32) -> (i32, i32) {
    %c0_i32 = arith.constant 0 : i32
    %c0_i32_0 = arith.constant 0 : i32
    return %arg0, %c0_i32 : i32, i32
  }
}

</mosaic_0001>

<llo_original>
// kernel: lstm_classifier_forward.1
$region0: #{lstm_classifier_forward.1}
  #allocation0 [shape = 'u32[]', space=smem, size = 0x4, offset = 0x4, fixed_abs, tag = 'smem constant byte address 0x4 - core index']
  #allocation1 [shape = 'u32[144,128]{1,0:T(1,128)}', space=vmem, size = 0x12000, scoped, tag = 'internal scratch']
  %s0 = inlined_call_operand.vmem [shape: f32[8,8], index: 0, kind: input, shape index: {}]
  %s1 = inlined_call_operand.vmem [shape: f32[1,512], index: 1, kind: input, shape index: {}]
  %s2 = inlined_call_operand.hbm [shape: f32[128,512], index: 2, kind: input, shape index: {}]
  %s3 = inlined_call_operand.vmem [shape: f32[1,512], index: 3, kind: input, shape index: {}]
  %s4 = inlined_call_operand.hbm [shape: f32[128,128], index: 4, kind: input, shape index: {}]
  %s5 = inlined_call_operand.vmem [shape: f32[1,128], index: 5, kind: input, shape index: {}]
  %s6 = inlined_call_operand.vmem [shape: f32[8,128], index: 6, kind: output, shape index: {}]
  %s7 = sld [smem:[#allocation0]]
  $region42: #{lstm_classifier_forward.1} parent=0
    _
  %s9 = ssub.s32 1, %s7
  %s10 = scalar_select 0, %s9, %s7
  $region1: #{lstm_classifier_forward.1} parent=0
    #allocation2 [shape = 'u8[262144]{0}', space=vmem, size = 0x40000, scoped, tag = 'input window, operand 2, single buffered']
    #allocation3 [shape = 's32[1]{0}', space=sflag, size = 0x4, scoped, tag = 'scoped memory for lstm_classifier_forward.1']
    #allocation4 [shape = 'u8[65536]{0}', space=vmem, size = 0x10000, scoped, tag = 'input window, operand 4, single buffered']
    #allocation5 [shape = 's32[1]{0}', space=sflag, size = 0x4, scoped, tag = 'scoped memory for lstm_classifier_forward.1']
    %11 = vsyncpa [#allocation3], 0
    %12 = vsyncpa [#allocation5], 0
    // Predicated region
    $region2: #{lstm_classifier_forward.1} parent=1 // pred_check
      _
    $region3: #{lstm_classifier_forward.1} parent=1 // pred_check_branch
      %14 = sbr.rel (0) target = $region5
    $region4: #{lstm_classifier_forward.1} parent=1 // pred_region
      _
    $region5: #{lstm_classifier_forward.1} parent=1 // pred_fallthru
      _
    // Predicated region
    $region6: #{lstm_classifier_forward.1} parent=1 // pred_check
      _
    $region7: #{lstm_classifier_forward.1} parent=1 // pred_check_branch
      %16 = sbr.rel (0) target = $region9
    $region8: #{lstm_classifier_forward.1} parent=1 // pred_region
      _
    $region9: #{lstm_classifier_forward.1} parent=1 // pred_fallthru
      _
    // Predicated region
    $region10: #{lstm_classifier_forward.1} parent=1 // pred_check
      _
    $region11: #{lstm_classifier_forward.1} parent=1 // pred_check_branch
      %18 = sbr.rel (0) target = $region13
    $region12: #{lstm_classifier_forward.1} parent=1 // pred_region
      %s20 = ssub.s32 8192, 8192
      %21 = vsyncadd [#allocation3], %s20
      %s22 = sshll.u32 [#allocation2], 4
      %s23 = int_to_ptr.vmem [resolvable:$true] %s22
      %28 = dma.hbm_to_vmem [thread:$0]  %s2, 8192, %s23, [#allocation3], 512, 512, 32
    $region13: #{lstm_classifier_forward.1} parent=1 // pred_fallthru
      _
    // Predicated region
    $region14: #{lstm_classifier_forward.1} parent=1 // pred_check
      _
    $region15: #{lstm_classifier_forward.1} parent=1 // pred_check_branch
      %30 = sbr.rel (0) target = $region17
    $region16: #{lstm_classifier_forward.1} parent=1 // pred_region
      _
    $region17: #{lstm_classifier_forward.1} parent=1 // pred_fallthru
      _
    // Predicated region
    $region18: #{lstm_classifier_forward.1} parent=1 // pred_check
      _
    $region19: #{lstm_classifier_forward.1} parent=1 // pred_check_branch
      %32 = sbr.rel (0) target = $region21
    $region20: #{lstm_classifier_forward.1} parent=1 // pred_region
      %s34 = ssub.s32 2048, 2048
      %35 = vsyncadd [#allocation5], %s34
      %s36 = sshll.u32 [#allocation4], 4
      %s37 = int_to_ptr.vmem [resolvable:$true] %s36
      %42 = dma.hbm_to_vmem [thread:$0]  %s4, 2048, %s37, [#allocation5], 128, 128, 8
    $region21: #{lstm_classifier_forward.1} parent=1 // pred_fallthru
      _
    // Predicated region
    $region22: #{lstm_classifier_forward.1} parent=1 // pred_check
      _
    $region23: #{lstm_classifier_forward.1} parent=1 // pred_check_branch
      %44 = sbr.rel (0) target = $region25
    $region24: #{lstm_classifier_forward.1} parent=1 // pred_region
      _
    $region25: #{lstm_classifier_forward.1} parent=1 // pred_fallthru
      _
    // Predicated region
    $region26: #{lstm_classifier_forward.1} parent=1 // pred_check
      _
    $region27: #{lstm_classifier_forward.1} parent=1 // pred_check_branch
      %46 = sbr.rel (0) target = $region29
    $region28: #{lstm_classifier_forward.1} parent=1 // pred_region
      %47 = dma.done [#allocation3], 8192
    $region29: #{lstm_classifier_forward.1} parent=1 // pred_fallthru
      _
    // Predicated region
    $region30: #{lstm_classifier_forward.1} parent=1 // pred_check
      _
    $region31: #{lstm_classifier_forward.1} parent=1 // pred_check_branch
      %49 = sbr.rel (0) target = $region33
    $region32: #{lstm_classifier_forward.1} parent=1 // pred_region
      %50 = dma.done [#allocation5], 2048
    $region33: #{lstm_classifier_forward.1} parent=1 // pred_fallthru
      _
    %v51 = vld [vmem:[#allocation2] sm:$0xff]
    %v52 = vld [vmem:[#allocation2 + $0x8] sm:$0xff]
    %v53 = vld [vmem:[#allocation2 + $0x10] sm:$0xff]
    %v54 = vld [vmem:[#allocation2 + $0x18] sm:$0xff]
    %v55 = vld [vmem:[#allocation2 + $0x20] sm:$0xff]
    %v56 = vld [vmem:[#allocation2 + $0x28] sm:$0xff]
    %v57 = vld [vmem:[#allocation2 + $0x30] sm:$0xff]
    %v58 = vld [vmem:[#allocation2 + $0x38] sm:$0xff]
    %v59 = vld [vmem:[#allocation2 + $0x40] sm:$0xff]
    %v60 = vld [vmem:[#allocation2 + $0x48] sm:$0xff]
    %v61 = vld [vmem:[#allocation2 + $0x50] sm:$0xff]
    %v62 = vld [vmem:[#allocation2 + $0x58] sm:$0xff]
    %v63 = vld [vmem:[#allocation2 + $0x60] sm:$0xff]
    %v64 = vld [vmem:[#allocation2 + $0x68] sm:$0xff]
    %v65 = vld [vmem:[#allocation2 + $0x70] sm:$0xff]
    %v66 = vld [vmem:[#allocation2 + $0x78] sm:$0xff]
    %v67 = vld [vmem:[#allocation2 + $0x80] sm:$0xff]
    %v68 = vld [vmem:[#allocation2 + $0x88] sm:$0xff]
    %v69 = vld [vmem:[#allocation2 + $0x90] sm:$0xff]
    %v70 = vld [vmem:[#allocation2 + $0x98] sm:$0xff]
    %v71 = vld [vmem:[#allocation2 + $0xa0] sm:$0xff]
    %v72 = vld [vmem:[#allocation2 + $0xa8] sm:$0xff]
    %v73 = vld [vmem:[#allocation2 + $0xb0] sm:$0xff]
    %v74 = vld [vmem:[#allocation2 + $0xb8] sm:$0xff]
    %v75 = vld [vmem:[#allocation2 + $0xc0] sm:$0xff]
    %v76 = vld [vmem:[#allocation2 + $0xc8] sm:$0xff]
    %v77 = vld [vmem:[#allocation2 + $0xd0] sm:$0xff]
    %v78 = vld [vmem:[#allocation2 + $0xd8] sm:$0xff]
    %v79 = vld [vmem:[#allocation2 + $0xe0] sm:$0xff]
    %v80 = vld [vmem:[#allocation2 + $0xe8] sm:$0xff]
    %v81 = vld [vmem:[#allocation2 + $0xf0] sm:$0xff]
    %v82 = vld [vmem:[#allocation2 + $0xf8] sm:$0xff]
    %v83 = vld [vmem:[#allocation2 + $0x100] sm:$0xff]
    %v84 = vld [vmem:[#allocation2 + $0x108] sm:$0xff]
    %v85 = vld [vmem:[#allocation2 + $0x110] sm:$0xff]
    %v86 = vld [vmem:[#allocation2 + $0x118] sm:$0xff]
    %v87 = vld [vmem:[#allocation2 + $0x120] sm:$0xff]
    %v88 = vld [vmem:[#allocation2 + $0x128] sm:$0xff]
    %v89 = vld [vmem:[#allocation2 + $0x130] sm:$0xff]
    %v90 = vld [vmem:[#allocation2 + $0x138] sm:$0xff]
    %v91 = vld [vmem:[#allocation2 + $0x140] sm:$0xff]
    %v92 = vld [vmem:[#allocation2 + $0x148] sm:$0xff]
    %v93 = vld [vmem:[#allocation2 + $0x150] sm:$0xff]
    %v94 = vld [vmem:[#allocation2 + $0x158] sm:$0xff]
    %v95 = vld [vmem:[#allocation2 + $0x160] sm:$0xff]
    %v96 = vld [vmem:[#allocation2 + $0x168] sm:$0xff]
    %v97 = vld [vmem:[#allocation2 + $0x170] sm:$0xff]
    %v98 = vld [vmem:[#allocation2 + $0x178] sm:$0xff]
    %v99 = vld [vmem:[#allocation2 + $0x180] sm:$0xff]
    %v100 = vld [vmem:[#allocation2 + $0x188] sm:$0xff]
    %v101 = vld [vmem:[#allocation2 + $0x190] sm:$0xff]
    %v102 = vld [vmem:[#allocation2 + $0x198] sm:$0xff]
    %v103 = vld [vmem:[#allocation2 + $0x1a0] sm:$0xff]
    %v104 = vld [vmem:[#allocation2 + $0x1a8] sm:$0xff]
    %v105 = vld [vmem:[#allocation2 + $0x1b0] sm:$0xff]
    %v106 = vld [vmem:[#allocation2 + $0x1b8] sm:$0xff]
    %v107 = vld [vmem:[#allocation2 + $0x1c0] sm:$0xff]
    %v108 = vld [vmem:[#allocation2 + $0x1c8] sm:$0xff]
    %v109 = vld [vmem:[#allocation2 + $0x1d0] sm:$0xff]
    %v110 = vld [vmem:[#allocation2 + $0x1d8] sm:$0xff]
    %v111 = vld [vmem:[#allocation2 + $0x1e0] sm:$0xff]
    %v112 = vld [vmem:[#allocation2 + $0x1e8] sm:$0xff]
    %v113 = vld [vmem:[#allocation2 + $0x1f0] sm:$0xff]
    %v114 = vld [vmem:[#allocation2 + $0x1f8] sm:$0xff]
    %v115 = vld [vmem:[%s1] sm:$0xf]
    %v116 = vld [vmem:[%s3] sm:$0xf]
    %v117 = vld [vmem:[%s0] sm:$0xff]
    %119 = vset.pattern.permute.xlu0 0
    %120 = vperm.xlu0 %119, %v117
    %v121 = vpop.permute.xlu0 %120
    %v124 = vlaneseq
    %v125 = vshrl.u32 %v124, 7
    %v126 = vsub.s32 0, %v125
    %v127 = vrot.slane %v115, %v126
    %v128 = vlaneseq
    %v129 = vshrl.u32 %v128, 7
    %v130 = vsub.s32 1, %v129
    %v131 = vrot.slane %v115, %v130
    %v132 = vlaneseq
    %v133 = vshrl.u32 %v132, 7
    %v134 = vsub.s32 2, %v133
    %v135 = vrot.slane %v115, %v134
    %v136 = vlaneseq
    %v137 = vshrl.u32 %v136, 7
    %v138 = vsub.s32 3, %v137
    %v139 = vrot.slane %v115, %v138
    %v144 = vmul.f32 %v121, %v127
    %v145 = vmul.f32 %v121, %v131
    %v146 = vmul.f32 %v121, %v135
    %v147 = vmul.f32 %v121, %v139
    %v149 = vlaneseq
    %v150 = vshrl.u32 %v149, 7
    %v151 = vsub.s32 0, %v150
    %v152 = vrot.slane %v116, %v151
    %v153 = vlaneseq
    %v154 = vshrl.u32 %v153, 7
    %v155 = vsub.s32 1, %v154
    %v156 = vrot.slane %v116, %v155
    %v157 = vlaneseq
    %v158 = vshrl.u32 %v157, 7
    %v159 = vsub.s32 2, %v158
    %v160 = vrot.slane %v116, %v159
    %v161 = vlaneseq
    %v162 = vshrl.u32 %v161, 7
    %v163 = vsub.s32 3, %v162
    %v164 = vrot.slane %v116, %v163
    %v169 = vadd.f32 %v144, %v152
    %v170 = vadd.f32 %v145, %v156
    %v171 = vadd.f32 %v146, %v160
    %v172 = vadd.f32 %v147, %v164
    %173 = vmatprep.subr.mxu0 %v112
    %174 = vmatpush1.msra.mxu0 %v111
    %175 = vmatprep.subr.mxu0 %v108
    %176 = vmatpush1.msra.mxu0 %v107
    %177 = vmatprep.subr.mxu0 %v104
    %178 = vmatpush1.msra.mxu0 %v103
    %179 = vmatprep.subr.mxu0 %v100
    %180 = vmatpush1.msra.mxu0 %v99
    %181 = vmatprep.subr.mxu0 %v96
    %182 = vmatpush1.msra.mxu0 %v95
    %183 = vmatprep.subr.mxu0 %v92
    %184 = vmatpush1.msra.mxu0 %v91
    %185 = vmatprep.subr.mxu0 %v88
    %186 = vmatpush1.msra.mxu0 %v87
    %187 = vmatprep.subr.mxu0 %v84
    %188 = vmatpush1.msra.mxu0 %v83
    %189 = vmatprep.subr.mxu0 %v80
    %190 = vmatpush1.msra.mxu0 %v79
    %191 = vmatprep.subr.mxu0 %v76
    %192 = vmatpush1.msra.mxu0 %v75
    %193 = vmatprep.subr.mxu0 %v72
    %194 = vmatpush1.msra.mxu0 %v71
    %195 = vmatprep.subr.mxu0 %v68
    %196 = vmatpush1.msra.mxu0 %v67
    %197 = vmatprep.subr.mxu0 %v64
    %198 = vmatpush1.msra.mxu0 %v63
    %199 = vmatprep.subr.mxu0 %v60
    %200 = vmatpush1.msra.mxu0 %v59
    %201 = vmatprep.subr.mxu0 %v56
    %202 = vmatpush1.msra.mxu0 %v55
    %203 = vmatprep.subr.mxu0 %v52
    %204 = vmatpush1.msra.mxu0 %v51
    %205 = vmatprep.subr.mxu0 0.0
    %206 = vmatpush2.msra.mxu0 0.0
    %207 = vmatprep.subr.mxu0 0.0
    %208 = vmatpush2.msra.mxu0 0.0
    %209 = vmatprep.subr.mxu0 0.0
    %210 = vmatpush2.msra.mxu0 0.0
    %211 = vmatprep.subr.mxu0 0.0
    %212 = vmatpush2.msra.mxu0 0.0
    %213 = vmatprep.subr.mxu0 0.0
    %214 = vmatpush2.msra.mxu0 0.0
    %215 = vmatprep.subr.mxu0 0.0
    %216 = vmatpush2.msra.mxu0 0.0
    %217 = vmatprep.subr.mxu0 0.0
    %218 = vmatpush2.msra.mxu0 0.0
    %219 = vmatprep.subr.mxu0 0.0
    %220 = vmatpush2.msra.mxu0 0.0
    %221 = vmatprep.subr.mxu0 0.0
    %222 = vmatpush2.msra.mxu0 0.0
    %223 = vmatprep.subr.mxu0 0.0
    %224 = vmatpush2.msra.mxu0 0.0
    %225 = vmatprep.subr.mxu0 0.0
    %226 = vmatpush2.msra.mxu0 0.0
    %227 = vmatprep.subr.mxu0 0.0
    %228 = vmatpush2.msra.mxu0 0.0
    %229 = vmatprep.subr.mxu0 0.0
    %230 = vmatpush2.msra.mxu0 0.0
    %231 = vmatprep.subr.mxu0 0.0
    %232 = vmatpush2.msra.mxu0 0.0
    %233 = vmatprep.subr.mxu0 0.0
    %234 = vmatpush2.msra.mxu0 0.0
    %235 = vmatprep.subr.mxu0 0.0
    %236 = vmatpush2.msra.mxu0 0.0
    %237 = vmatprep.mubr.f32.mxu0 0.0
    %238 = vmatmul.mubr.f32.gmra.mxu0 0.0
    %v239 = vpop.f32.mrf.mxu0
    %v240 = vadd.f32 %v169, %v239
    %v241 = vpop.f32.mrf.mxu0
    %v242 = vadd.f32 %v170, %v241
    %243 = vdwg.mxu0
    %244 = vmatprep.subr.mxu0 %v114
    %245 = vmatpush1.msra.mxu0 %v113
    %246 = vmatprep.subr.mxu0 %v110
    %247 = vmatpush1.msra.mxu0 %v109
    %248 = vmatprep.subr.mxu0 %v106
    %249 = vmatpush1.msra.mxu0 %v105
    %250 = vmatprep.subr.mxu0 %v102
    %251 = vmatpush1.msra.mxu0 %v101
    %252 = vmatprep.subr.mxu0 %v98
    %253 = vmatpush1.msra.mxu0 %v97
    %254 = vmatprep.subr.mxu0 %v94
    %255 = vmatpush1.msra.mxu0 %v93
    %256 = vmatprep.subr.mxu0 %v90
    %257 = vmatpush1.msra.mxu0 %v89
    %258 = vmatprep.subr.mxu0 %v86
    %259 = vmatpush1.msra.mxu0 %v85
    %260 = vmatprep.subr.mxu0 %v82
    %261 = vmatpush1.msra.mxu0 %v81
    %262 = vmatprep.subr.mxu0 %v78
    %263 = vmatpush1.msra.mxu0 %v77
    %264 = vmatprep.subr.mxu0 %v74
    %265 = vmatpush1.msra.mxu0 %v73
    %266 = vmatprep.subr.mxu0 %v70
    %267 = vmatpush1.msra.mxu0 %v69
    %268 = vmatprep.subr.mxu0 %v66
    %269 = vmatpush1.msra.mxu0 %v65
    %270 = vmatprep.subr.mxu0 %v62
    %271 = vmatpush1.msra.mxu0 %v61
    %272 = vmatprep.subr.mxu0 %v58
    %273 = vmatpush1.msra.mxu0 %v57
    %274 = vmatprep.subr.mxu0 %v54
    %275 = vmatpush1.msra.mxu0 %v53
    %276 = vmatprep.subr.mxu0 0.0
    %277 = vmatpush2.msra.mxu0 0.0
    %278 = vmatprep.subr.mxu0 0.0
    %279 = vmatpush2.msra.mxu0 0.0
    %280 = vmatprep.subr.mxu0 0.0
    %281 = vmatpush2.msra.mxu0 0.0
    %282 = vmatprep.subr.mxu0 0.0
    %283 = vmatpush2.msra.mxu0 0.0
    %284 = vmatprep.subr.mxu0 0.0
    %285 = vmatpush2.msra.mxu0 0.0
    %286 = vmatprep.subr.mxu0 0.0
    %287 = vmatpush2.msra.mxu0 0.0
    %288 = vmatprep.subr.mxu0 0.0
    %289 = vmatpush2.msra.mxu0 0.0
    %290 = vmatprep.subr.mxu0 0.0
    %291 = vmatpush2.msra.mxu0 0.0
    %292 = vmatprep.subr.mxu0 0.0
    %293 = vmatpush2.msra.mxu0 0.0
    %294 = vmatprep.subr.mxu0 0.0
    %295 = vmatpush2.msra.mxu0 0.0
    %296 = vmatprep.subr.mxu0 0.0
    %297 = vmatpush2.msra.mxu0 0.0
    %298 = vmatprep.subr.mxu0 0.0
    %299 = vmatpush2.msra.mxu0 0.0
    %300 = vmatprep.subr.mxu0 0.0
    %301 = vmatpush2.msra.mxu0 0.0
    %302 = vmatprep.subr.mxu0 0.0
    %303 = vmatpush2.msra.mxu0 0.0
    %304 = vmatprep.subr.mxu0 0.0
    %305 = vmatpush2.msra.mxu0 0.0
    %306 = vmatprep.subr.mxu0 0.0
    %307 = vmatpush2.msra.mxu0 0.0
    %308 = vmatprep.mubr.f32.mxu0 0.0
    %309 = vmatmul.mubr.f32.gmra.mxu0 0.0
    %v310 = vpop.f32.mrf.mxu0
    %v311 = vadd.f32 %v171, %v310
    %v312 = vpop.f32.mrf.mxu0
    %v313 = vadd.f32 %v172, %v312
    %314 = vdwg.mxu0
    %v315 = vxor.u32 %v240, 2147483648
    %v316 = vxor.u32 %v242, 2147483648
    %v317 = vxor.u32 %v311, 2147483648
    %v318 = vmul.f32 %v315, 1.442695
    %v319 = vpow.pop %v318
    %v320 = vmul.f32 %v316, 1.442695
    %v321 = vpow.pop %v320
    %v322 = vmul.f32 %v317, 1.442695
    %v323 = vpow.pop %v322
    %v324 = vadd.f32 %v319, 1.0
    %v325 = vadd.f32 %v321, 1.0
    %v326 = vadd.f32 %v323, 1.0
    %v327 = vrcp.pop %v324
    %v328 = vmul.f32 1.0, %v327
    %v329 = vrcp.pop %v325
    %v330 = vmul.f32 1.0, %v329
    %v331 = vrcp.pop %v326
    %v332 = vmul.f32 1.0, %v331
    %v333 = vtanh.pop %v313
    %v334 = vmul.f32 %v330, 0.0
    %v335 = vmul.f32 %v328, %v333
    %v336 = vadd.f32 %v334, %v335
    %v337 = vtanh.pop %v336
    %v338 = vmul.f32 %v332, %v337
    %339 = vset.pattern.permute.xlu0 1
    %340 = vperm.xlu0 %339, %v117
    %v341 = vpop.permute.xlu0 %340
    %v343 = vmul.f32 %v341, %v127
    %v344 = vmul.f32 %v341, %v131
    %v345 = vmul.f32 %v341, %v135
    %v346 = vmul.f32 %v341, %v139
    %v347 = vadd.f32 %v343, %v152
    %v348 = vadd.f32 %v344, %v156
    %v349 = vadd.f32 %v345, %v160
    %v350 = vadd.f32 %v346, %v164
    %351 = vmatprep.subr.mxu0 %v112
    %352 = vmatpush1.msra.mxu0 %v111
    %353 = vmatprep.subr.mxu0 %v108
    %354 = vmatpush1.msra.mxu0 %v107
    %355 = vmatprep.subr.mxu0 %v104
    %356 = vmatpush1.msra.mxu0 %v103
    %357 = vmatprep.subr.mxu0 %v100
    %358 = vmatpush1.msra.mxu0 %v99
    %359 = vmatprep.subr.mxu0 %v96
    %360 = vmatpush1.msra.mxu0 %v95
    %361 = vmatprep.subr.mxu0 %v92
    %362 = vmatpush1.msra.mxu0 %v91
    %363 = vmatprep.subr.mxu0 %v88
    %364 = vmatpush1.msra.mxu0 %v87
    %365 = vmatprep.subr.mxu0 %v84
    %366 = vmatpush1.msra.mxu0 %v83
    %367 = vmatprep.subr.mxu0 %v80
    %368 = vmatpush1.msra.mxu0 %v79
    %369 = vmatprep.subr.mxu0 %v76
    %370 = vmatpush1.msra.mxu0 %v75
    %371 = vmatprep.subr.mxu0 %v72
    %372 = vmatpush1.msra.mxu0 %v71
    %373 = vmatprep.subr.mxu0 %v68
    %374 = vmatpush1.msra.mxu0 %v67
    %375 = vmatprep.subr.mxu0 %v64
    %376 = vmatpush1.msra.mxu0 %v63
    %377 = vmatprep.subr.mxu0 %v60
    %378 = vmatpush1.msra.mxu0 %v59
    %379 = vmatprep.subr.mxu0 %v56
    %380 = vmatpush1.msra.mxu0 %v55
    %381 = vmatprep.subr.mxu0 %v52
    %382 = vmatpush1.msra.mxu0 %v51
    %383 = vmatprep.subr.mxu0 0.0
    %384 = vmatpush2.msra.mxu0 0.0
    %385 = vmatprep.subr.mxu0 0.0
    %386 = vmatpush2.msra.mxu0 0.0
    %387 = vmatprep.subr.mxu0 0.0
    %388 = vmatpush2.msra.mxu0 0.0
    %389 = vmatprep.subr.mxu0 0.0
    %390 = vmatpush2.msra.mxu0 0.0
    %391 = vmatprep.subr.mxu0 0.0
    %392 = vmatpush2.msra.mxu0 0.0
    %393 = vmatprep.subr.mxu0 0.0
    %394 = vmatpush2.msra.mxu0 0.0
    %395 = vmatprep.subr.mxu0 0.0
    %396 = vmatpush2.msra.mxu0 0.0
    %397 = vmatprep.subr.mxu0 0.0
    %398 = vmatpush2.msra.mxu0 0.0
    %399 = vmatprep.subr.mxu0 0.0
    %400 = vmatpush2.msra.mxu0 0.0
    %401 = vmatprep.subr.mxu0 0.0
    %402 = vmatpush2.msra.mxu0 0.0
    %403 = vmatprep.subr.mxu0 0.0
    %404 = vmatpush2.msra.mxu0 0.0
    %405 = vmatprep.subr.mxu0 0.0
    %406 = vmatpush2.msra.mxu0 0.0
    %407 = vmatprep.subr.mxu0 0.0
    %408 = vmatpush2.msra.mxu0 0.0
    %409 = vmatprep.subr.mxu0 0.0
    %410 = vmatpush2.msra.mxu0 0.0
    %411 = vmatprep.subr.mxu0 0.0
    %412 = vmatpush2.msra.mxu0 0.0
    %413 = vmatprep.subr.mxu0 0.0
    %414 = vmatpush2.msra.mxu0 0.0
    %415 = vmatprep.mubr.f32.mxu0 0.0
    %416 = vmatmul.mubr.f32.gmra.mxu0 %v338
    %v417 = vpop.f32.mrf.mxu0
    %v418 = vadd.f32 %v347, %v417
    %v419 = vpop.f32.mrf.mxu0
    %v420 = vadd.f32 %v348, %v419
    %421 = vdwg.mxu0
    %422 = vmatprep.subr.mxu0 %v114
    %423 = vmatpush1.msra.mxu0 %v113
    %424 = vmatprep.subr.mxu0 %v110
    %425 = vmatpush1.msra.mxu0 %v109
    %426 = vmatprep.subr.mxu0 %v106
    %427 = vmatpush1.msra.mxu0 %v105
    %428 = vmatprep.subr.mxu0 %v102
    %429 = vmatpush1.msra.mxu0 %v101
    %430 = vmatprep.subr.mxu0 %v98
    %431 = vmatpush1.msra.mxu0 %v97
    %432 = vmatprep.subr.mxu0 %v94
    %433 = vmatpush1.msra.mxu0 %v93
    %434 = vmatprep.subr.mxu0 %v90
    %435 = vmatpush1.msra.mxu0 %v89
    %436 = vmatprep.subr.mxu0 %v86
    %437 = vmatpush1.msra.mxu0 %v85
    %438 = vmatprep.subr.mxu0 %v82
    %439 = vmatpush1.msra.mxu0 %v81
    %440 = vmatprep.subr.mxu0 %v78
    %441 = vmatpush1.msra.mxu0 %v77
    %442 = vmatprep.subr.mxu0 %v74
    %443 = vmatpush1.msra.mxu0 %v73
    %444 = vmatprep.subr.mxu0 %v70
    %445 = vmatpush1.msra.mxu0 %v69
    %446 = vmatprep.subr.mxu0 %v66
    %447 = vmatpush1.msra.mxu0 %v65
    %448 = vmatprep.subr.mxu0 %v62
    %449 = vmatpush1.msra.mxu0 %v61
    %450 = vmatprep.subr.mxu0 %v58
    %451 = vmatpush1.msra.mxu0 %v57
    %452 = vmatprep.subr.mxu0 %v54
    %453 = vmatpush1.msra.mxu0 %v53
    %454 = vmatprep.subr.mxu0 0.0
    %455 = vmatpush2.msra.mxu0 0.0
    %456 = vmatprep.subr.mxu0 0.0
    %457 = vmatpush2.msra.mxu0 0.0
    %458 = vmatprep.subr.mxu0 0.0
    %459 = vmatpush2.msra.mxu0 0.0
    %460 = vmatprep.subr.mxu0 0.0
    %461 = vmatpush2.msra.mxu0 0.0
    %462 = vmatprep.subr.mxu0 0.0
    %463 = vmatpush2.msra.mxu0 0.0
    %464 = vmatprep.subr.mxu0 0.0
    %465 = vmatpush2.msra.mxu0 0.0
    %466 = vmatprep.subr.mxu0 0.0
    %467 = vmatpush2.msra.mxu0 0.0
    %468 = vmatprep.subr.mxu0 0.0
    %469 = vmatpush2.msra.mxu0 0.0
    %470 = vmatprep.subr.mxu0 0.0
    %471 = vmatpush2.msra.mxu0 0.0
    %472 = vmatprep.subr.mxu0 0.0
    %473 = vmatpush2.msra.mxu0 0.0
    %474 = vmatprep.subr.mxu0 0.0
    %475 = vmatpush2.msra.mxu0 0.0
    %476 = vmatprep.subr.mxu0 0.0
    %477 = vmatpush2.msra.mxu0 0.0
    %478 = vmatprep.subr.mxu0 0.0
    %479 = vmatpush2.msra.mxu0 0.0
    %480 = vmatprep.subr.mxu0 0.0
    %481 = vmatpush2.msra.mxu0 0.0
    %482 = vmatprep.subr.mxu0 0.0
    %483 = vmatpush2.msra.mxu0 0.0
    %484 = vmatprep.subr.mxu0 0.0
    %485 = vmatpush2.msra.mxu0 0.0
    %486 = vmatprep.mubr.f32.mxu0 0.0
    %487 = vmatmul.mubr.f32.gmra.mxu0 %v338
    %v488 = vpop.f32.mrf.mxu0
    %v489 = vadd.f32 %v349, %v488
    %v490 = vpop.f32.mrf.mxu0
    %v491 = vadd.f32 %v350, %v490
    %492 = vdwg.mxu0
    %v493 = vxor.u32 %v418, 2147483648
    %v494 = vxor.u32 %v420, 2147483648
    %v495 = vxor.u32 %v489, 2147483648
    %v496 = vmul.f32 %v493, 1.442695
    %v497 = vpow.pop %v496
    %v498 = vmul.f32 %v494, 1.442695
    %v499 = vpow.pop %v498
    %v500 = vmul.f32 %v495, 1.442695
    %v501 = vpow.pop %v500
    %v502 = vadd.f32 %v497, 1.0
    %v503 = vadd.f32 %v499, 1.0
    %v504 = vadd.f32 %v501, 1.0
    %v505 = vrcp.pop %v502
    %v506 = vmul.f32 1.0, %v505
    %v507 = vrcp.pop %v503
    %v508 = vmul.f32 1.0, %v507
    %v509 = vrcp.pop %v504
    %v510 = vmul.f32 1.0, %v509
    %v511 = vtanh.pop %v491
    %v512 = vmul.f32 %v508, %v336
    %v513 = vmul.f32 %v506, %v511
    %v514 = vadd.f32 %v512, %v513
    %v515 = vtanh.pop %v514
    %v516 = vmul.f32 %v510, %v515
    %517 = vset.pattern.permute.xlu0 2
    %518 = vperm.xlu0 %517, %v117
    %v519 = vpop.permute.xlu0 %518
    %v521 = vmul.f32 %v519, %v127
    %v522 = vmul.f32 %v519, %v131
    %v523 = vmul.f32 %v519, %v135
    %v524 = vmul.f32 %v519, %v139
    %v525 = vadd.f32 %v521, %v152
    %v526 = vadd.f32 %v522, %v156
    %v527 = vadd.f32 %v523, %v160
    %v528 = vadd.f32 %v524, %v164
    %529 = vmatprep.subr.mxu0 %v112
    %530 = vmatpush1.msra.mxu0 %v111
    %531 = vmatprep.subr.mxu0 %v108
    %532 = vmatpush1.msra.mxu0 %v107
    %533 = vmatprep.subr.mxu0 %v104
    %534 = vmatpush1.msra.mxu0 %v103
    %535 = vmatprep.subr.mxu0 %v100
    %536 = vmatpush1.msra.mxu0 %v99
    %537 = vmatprep.subr.mxu0 %v96
    %538 = vmatpush1.msra.mxu0 %v95
    %539 = vmatprep.subr.mxu0 %v92
    %540 = vmatpush1.msra.mxu0 %v91
    %541 = vmatprep.subr.mxu0 %v88
    %542 = vmatpush1.msra.mxu0 %v87
    %543 = vmatprep.subr.mxu0 %v84
    %544 = vmatpush1.msra.mxu0 %v83
    %545 = vmatprep.subr.mxu0 %v80
    %546 = vmatpush1.msra.mxu0 %v79
    %547 = vmatprep.subr.mxu0 %v76
    %548 = vmatpush1.msra.mxu0 %v75
    %549 = vmatprep.subr.mxu0 %v72
    %550 = vmatpush1.msra.mxu0 %v71
    %551 = vmatprep.subr.mxu0 %v68
    %552 = vmatpush1.msra.mxu0 %v67
    %553 = vmatprep.subr.mxu0 %v64
    %554 = vmatpush1.msra.mxu0 %v63
    %555 = vmatprep.subr.mxu0 %v60
    %556 = vmatpush1.msra.mxu0 %v59
    %557 = vmatprep.subr.mxu0 %v56
    %558 = vmatpush1.msra.mxu0 %v55
    %559 = vmatprep.subr.mxu0 %v52
    %560 = vmatpush1.msra.mxu0 %v51
    %561 = vmatprep.subr.mxu0 0.0
    %562 = vmatpush2.msra.mxu0 0.0
    %563 = vmatprep.subr.mxu0 0.0
    %564 = vmatpush2.msra.mxu0 0.0
    %565 = vmatprep.subr.mxu0 0.0
    %566 = vmatpush2.msra.mxu0 0.0
    %567 = vmatprep.subr.mxu0 0.0
    %568 = vmatpush2.msra.mxu0 0.0
    %569 = vmatprep.subr.mxu0 0.0
    %570 = vmatpush2.msra.mxu0 0.0
    %571 = vmatprep.subr.mxu0 0.0
    %572 = vmatpush2.msra.mxu0 0.0
    %573 = vmatprep.subr.mxu0 0.0
    %574 = vmatpush2.msra.mxu0 0.0
    %575 = vmatprep.subr.mxu0 0.0
    %576 = vmatpush2.msra.mxu0 0.0
    %577 = vmatprep.subr.mxu0 0.0
    %578 = vmatpush2.msra.mxu0 0.0
    %579 = vmatprep.subr.mxu0 0.0
    %580 = vmatpush2.msra.mxu0 0.0
    %581 = vmatprep.subr.mxu0 0.0
    %582 = vmatpush2.msra.mxu0 0.0
    %583 = vmatprep.subr.mxu0 0.0
    %584 = vmatpush2.msra.mxu0 0.0
    %585 = vmatprep.subr.mxu0 0.0
    %586 = vmatpush2.msra.mxu0 0.0
    %587 = vmatprep.subr.mxu0 0.0
    %588 = vmatpush2.msra.mxu0 0.0
    %589 = vmatprep.subr.mxu0 0.0
    %590 = vmatpush2.msra.mxu0 0.0
    %591 = vmatprep.subr.mxu0 0.0
    %592 = vmatpush2.msra.mxu0 0.0
    %593 = vmatprep.mubr.f32.mxu0 0.0
    %594 = vmatmul.mubr.f32.gmra.mxu0 %v516
    %v595 = vpop.f32.mrf.mxu0
    %v596 = vadd.f32 %v525, %v595
    %v597 = vpop.f32.mrf.mxu0
    %v598 = vadd.f32 %v526, %v597
    %599 = vdwg.mxu0
    %600 = vmatprep.subr.mxu0 %v114
    %601 = vmatpush1.msra.mxu0 %v113
    %602 = vmatprep.subr.mxu0 %v110
    %603 = vmatpush1.msra.mxu0 %v109
    %604 = vmatprep.subr.mxu0 %v106
    %605 = vmatpush1.msra.mxu0 %v105
    %606 = vmatprep.subr.mxu0 %v102
    %607 = vmatpush1.msra.mxu0 %v101
    %608 = vmatprep.subr.mxu0 %v98
    %609 = vmatpush1.msra.mxu0 %v97
    %610 = vmatprep.subr.mxu0 %v94
    %611 = vmatpush1.msra.mxu0 %v93
    %612 = vmatprep.subr.mxu0 %v90
    %613 = vmatpush1.msra.mxu0 %v89
    %614 = vmatprep.subr.mxu0 %v86
    %615 = vmatpush1.msra.mxu0 %v85
    %616 = vmatprep.subr.mxu0 %v82
    %617 = vmatpush1.msra.mxu0 %v81
    %618 = vmatprep.subr.mxu0 %v78
    %619 = vmatpush1.msra.mxu0 %v77
    %620 = vmatprep.subr.mxu0 %v74
    %621 = vmatpush1.msra.mxu0 %v73
    %622 = vmatprep.subr.mxu0 %v70
    %623 = vmatpush1.msra.mxu0 %v69
    %624 = vmatprep.subr.mxu0 %v66
    %625 = vmatpush1.msra.mxu0 %v65
    %626 = vmatprep.subr.mxu0 %v62
    %627 = vmatpush1.msra.mxu0 %v61
    %628 = vmatprep.subr.mxu0 %v58
    %629 = vmatpush1.msra.mxu0 %v57
    %630 = vmatprep.subr.mxu0 %v54
    %631 = vmatpush1.msra.mxu0 %v53
    %632 = vmatprep.subr.mxu0 0.0
    %633 = vmatpush2.msra.mxu0 0.0
    %634 = vmatprep.subr.mxu0 0.0
    %635 = vmatpush2.msra.mxu0 0.0
    %636 = vmatprep.subr.mxu0 0.0
    %637 = vmatpush2.msra.mxu0 0.0
    %638 = vmatprep.subr.mxu0 0.0
    %639 = vmatpush2.msra.mxu0 0.0
    %640 = vmatprep.subr.mxu0 0.0
    %641 = vmatpush2.msra.mxu0 0.0
    %642 = vmatprep.subr.mxu0 0.0
    %643 = vmatpush2.msra.mxu0 0.0
    %644 = vmatprep.subr.mxu0 0.0
    %645 = vmatpush2.msra.mxu0 0.0
    %646 = vmatprep.subr.mxu0 0.0
    %647 = vmatpush2.msra.mxu0 0.0
    %648 = vmatprep.subr.mxu0 0.0
    %649 = vmatpush2.msra.mxu0 0.0
    %650 = vmatprep.subr.mxu0 0.0
    %651 = vmatpush2.msra.mxu0 0.0
    %652 = vmatprep.subr.mxu0 0.0
    %653 = vmatpush2.msra.mxu0 0.0
    %654 = vmatprep.subr.mxu0 0.0
    %655 = vmatpush2.msra.mxu0 0.0
    %656 = vmatprep.subr.mxu0 0.0
    %657 = vmatpush2.msra.mxu0 0.0
    %658 = vmatprep.subr.mxu0 0.0
    %659 = vmatpush2.msra.mxu0 0.0
    %660 = vmatprep.subr.mxu0 0.0
    %661 = vmatpush2.msra.mxu0 0.0
    %662 = vmatprep.subr.mxu0 0.0
    %663 = vmatpush2.msra.mxu0 0.0
    %664 = vmatprep.mubr.f32.mxu0 0.0
    %665 = vmatmul.mubr.f32.gmra.mxu0 %v516
    %v666 = vpop.f32.mrf.mxu0
    %v667 = vadd.f32 %v527, %v666
    %v668 = vpop.f32.mrf.mxu0
    %v669 = vadd.f32 %v528, %v668
    %670 = vdwg.mxu0
    %v671 = vxor.u32 %v596, 2147483648
    %v672 = vxor.u32 %v598, 2147483648
    %v673 = vxor.u32 %v667, 2147483648
    %v674 = vmul.f32 %v671, 1.442695
    %v675 = vpow.pop %v674
    %v676 = vmul.f32 %v672, 1.442695
    %v677 = vpow.pop %v676
    %v678 = vmul.f32 %v673, 1.442695
    %v679 = vpow.pop %v678
    %v680 = vadd.f32 %v675, 1.0
    %v681 = vadd.f32 %v677, 1.0
    %v682 = vadd.f32 %v679, 1.0
    %v683 = vrcp.pop %v680
    %v684 = vmul.f32 1.0, %v683
    %v685 = vrcp.pop %v681
    %v686 = vmul.f32 1.0, %v685
    %v687 = vrcp.pop %v682
    %v688 = vmul.f32 1.0, %v687
    %v689 = vtanh.pop %v669
    %v690 = vmul.f32 %v686, %v514
    %v691 = vmul.f32 %v684, %v689
    %v692 = vadd.f32 %v690, %v691
    %v693 = vtanh.pop %v692
    %v694 = vmul.f32 %v688, %v693
    %695 = vset.pattern.permute.xlu0 3
    %696 = vperm.xlu0 %695, %v117
    %v697 = vpop.permute.xlu0 %696
    %v699 = vmul.f32 %v697, %v127
    %v700 = vmul.f32 %v697, %v131
    %v701 = vmul.f32 %v697, %v135
    %v702 = vmul.f32 %v697, %v139
    %v703 = vadd.f32 %v699, %v152
    %v704 = vadd.f32 %v700, %v156
    %v705 = vadd.f32 %v701, %v160
    %v706 = vadd.f32 %v702, %v164
    %707 = vmatprep.subr.mxu0 %v112
    %708 = vmatpush1.msra.mxu0 %v111
    %709 = vmatprep.subr.mxu0 %v108
    %710 = vmatpush1.msra.mxu0 %v107
    %711 = vmatprep.subr.mxu0 %v104
    %712 = vmatpush1.msra.mxu0 %v103
    %713 = vmatprep.subr.mxu0 %v100
    %714 = vmatpush1.msra.mxu0 %v99
    %715 = vmatprep.subr.mxu0 %v96
    %716 = vmatpush1.msra.mxu0 %v95
    %717 = vmatprep.subr.mxu0 %v92
    %718 = vmatpush1.msra.mxu0 %v91
    %719 = vmatprep.subr.mxu0 %v88
    %720 = vmatpush1.msra.mxu0 %v87
    %721 = vmatprep.subr.mxu0 %v84
    %722 = vmatpush1.msra.mxu0 %v83
    %723 = vmatprep.subr.mxu0 %v80
    %724 = vmatpush1.msra.mxu0 %v79
    %725 = vmatprep.subr.mxu0 %v76
    %726 = vmatpush1.msra.mxu0 %v75
    %727 = vmatprep.subr.mxu0 %v72
    %728 = vmatpush1.msra.mxu0 %v71
    %729 = vmatprep.subr.mxu0 %v68
    %730 = vmatpush1.msra.mxu0 %v67
    %731 = vmatprep.subr.mxu0 %v64
    %732 = vmatpush1.msra.mxu0 %v63
    %733 = vmatprep.subr.mxu0 %v60
    %734 = vmatpush1.msra.mxu0 %v59
    %735 = vmatprep.subr.mxu0 %v56
    %736 = vmatpush1.msra.mxu0 %v55
    %737 = vmatprep.subr.mxu0 %v52
    %738 = vmatpush1.msra.mxu0 %v51
    %739 = vmatprep.subr.mxu0 0.0
    %740 = vmatpush2.msra.mxu0 0.0
    %741 = vmatprep.subr.mxu0 0.0
    %742 = vmatpush2.msra.mxu0 0.0
    %743 = vmatprep.subr.mxu0 0.0
    %744 = vmatpush2.msra.mxu0 0.0
    %745 = vmatprep.subr.mxu0 0.0
    %746 = vmatpush2.msra.mxu0 0.0
    %747 = vmatprep.subr.mxu0 0.0
    %748 = vmatpush2.msra.mxu0 0.0
    %749 = vmatprep.subr.mxu0 0.0
    %750 = vmatpush2.msra.mxu0 0.0
    %751 = vmatprep.subr.mxu0 0.0
    %752 = vmatpush2.msra.mxu0 0.0
    %753 = vmatprep.subr.mxu0 0.0
    %754 = vmatpush2.msra.mxu0 0.0
    %755 = vmatprep.subr.mxu0 0.0
    %756 = vmatpush2.msra.mxu0 0.0
    %757 = vmatprep.subr.mxu0 0.0
    %758 = vmatpush2.msra.mxu0 0.0
    %759 = vmatprep.subr.mxu0 0.0
    %760 = vmatpush2.msra.mxu0 0.0
    %761 = vmatprep.subr.mxu0 0.0
    %762 = vmatpush2.msra.mxu0 0.0
    %763 = vmatprep.subr.mxu0 0.0
    %764 = vmatpush2.msra.mxu0 0.0
    %765 = vmatprep.subr.mxu0 0.0
    %766 = vmatpush2.msra.mxu0 0.0
    %767 = vmatprep.subr.mxu0 0.0
    %768 = vmatpush2.msra.mxu0 0.0
    %769 = vmatprep.subr.mxu0 0.0
    %770 = vmatpush2.msra.mxu0 0.0
    %771 = vmatprep.mubr.f32.mxu0 0.0
    %772 = vmatmul.mubr.f32.gmra.mxu0 %v694
    %v773 = vpop.f32.mrf.mxu0
    %v774 = vadd.f32 %v703, %v773
    %v775 = vpop.f32.mrf.mxu0
    %v776 = vadd.f32 %v704, %v775
    %777 = vdwg.mxu0
    %778 = vmatprep.subr.mxu0 %v114
    %779 = vmatpush1.msra.mxu0 %v113
    %780 = vmatprep.subr.mxu0 %v110
    %781 = vmatpush1.msra.mxu0 %v109
    %782 = vmatprep.subr.mxu0 %v106
    %783 = vmatpush1.msra.mxu0 %v105
    %784 = vmatprep.subr.mxu0 %v102
    %785 = vmatpush1.msra.mxu0 %v101
    %786 = vmatprep.subr.mxu0 %v98
    %787 = vmatpush1.msra.mxu0 %v97
    %788 = vmatprep.subr.mxu0 %v94
    %789 = vmatpush1.msra.mxu0 %v93
    %790 = vmatprep.subr.mxu0 %v90
    %791 = vmatpush1.msra.mxu0 %v89
    %792 = vmatprep.subr.mxu0 %v86
    %793 = vmatpush1.msra.mxu0 %v85
    %794 = vmatprep.subr.mxu0 %v82
    %795 = vmatpush1.msra.mxu0 %v81
    %796 = vmatprep.subr.mxu0 %v78
    %797 = vmatpush1.msra.mxu0 %v77
    %798 = vmatprep.subr.mxu0 %v74
    %799 = vmatpush1.msra.mxu0 %v73
    %800 = vmatprep.subr.mxu0 %v70
    %801 = vmatpush1.msra.mxu0 %v69
    %802 = vmatprep.subr.mxu0 %v66
    %803 = vmatpush1.msra.mxu0 %v65
    %804 = vmatprep.subr.mxu0 %v62
    %805 = vmatpush1.msra.mxu0 %v61
    %806 = vmatprep.subr.mxu0 %v58
    %807 = vmatpush1.msra.mxu0 %v57
    %808 = vmatprep.subr.mxu0 %v54
    %809 = vmatpush1.msra.mxu0 %v53
    %810 = vmatprep.subr.mxu0 0.0
    %811 = vmatpush2.msra.mxu0 0.0
    %812 = vmatprep.subr.mxu0 0.0
    %813 = vmatpush2.msra.mxu0 0.0
    %814 = vmatprep.subr.mxu0 0.0
    %815 = vmatpush2.msra.mxu0 0.0
    %816 = vmatprep.subr.mxu0 0.0
    %817 = vmatpush2.msra.mxu0 0.0
    %818 = vmatprep.subr.mxu0 0.0
    %819 = vmatpush2.msra.mxu0 0.0
    %820 = vmatprep.subr.mxu0 0.0
    %821 = vmatpush2.msra.mxu0 0.0
    %822 = vmatprep.subr.mxu0 0.0
    %823 = vmatpush2.msra.mxu0 0.0
    %824 = vmatprep.subr.mxu0 0.0
    %825 = vmatpush2.msra.mxu0 0.0
    %826 = vmatprep.subr.mxu0 0.0
    %827 = vmatpush2.msra.mxu0 0.0
    %828 = vmatprep.subr.mxu0 0.0
    %829 = vmatpush2.msra.mxu0 0.0
    %830 = vmatprep.subr.mxu0 0.0
    %831 = vmatpush2.msra.mxu0 0.0
    %832 = vmatprep.subr.mxu0 0.0
    %833 = vmatpush2.msra.mxu0 0.0
    %834 = vmatprep.subr.mxu0 0.0
    %835 = vmatpush2.msra.mxu0 0.0
    %836 = vmatprep.subr.mxu0 0.0
    %837 = vmatpush2.msra.mxu0 0.0
    %838 = vmatprep.subr.mxu0 0.0
    %839 = vmatpush2.msra.mxu0 0.0
    %840 = vmatprep.subr.mxu0 0.0
    %841 = vmatpush2.msra.mxu0 0.0
    %842 = vmatprep.mubr.f32.mxu0 0.0
    %843 = vmatmul.mubr.f32.gmra.mxu0 %v694
    %v844 = vpop.f32.mrf.mxu0
    %v845 = vadd.f32 %v705, %v844
    %v846 = vpop.f32.mrf.mxu0
    %v847 = vadd.f32 %v706, %v846
    %848 = vdwg.mxu0
    %v849 = vxor.u32 %v774, 2147483648
    %v850 = vxor.u32 %v776, 2147483648
    %v851 = vxor.u32 %v845, 2147483648
    %v852 = vmul.f32 %v849, 1.442695
    %v853 = vpow.pop %v852
    %v854 = vmul.f32 %v850, 1.442695
    %v855 = vpow.pop %v854
    %v856 = vmul.f32 %v851, 1.442695
    %v857 = vpow.pop %v856
    %v858 = vadd.f32 %v853, 1.0
    %v859 = vadd.f32 %v855, 1.0
    %v860 = vadd.f32 %v857, 1.0
    %v861 = vrcp.pop %v858
    %v862 = vmul.f32 1.0, %v861
    %v863 = vrcp.pop %v859
    %v864 = vmul.f32 1.0, %v863
    %v865 = vrcp.pop %v860
    %v866 = vmul.f32 1.0, %v865
    %v867 = vtanh.pop %v847
    %v868 = vmul.f32 %v864, %v692
    %v869 = vmul.f32 %v862, %v867
    %v870 = vadd.f32 %v868, %v869
    %v871 = vtanh.pop %v870
    %v872 = vmul.f32 %v866, %v871
    %873 = vset.pattern.permute.xlu0 4
    %874 = vperm.xlu0 %873, %v117
    %v875 = vpop.permute.xlu0 %874
    %v877 = vmul.f32 %v875, %v127
    %v878 = vmul.f32 %v875, %v131
    %v879 = vmul.f32 %v875, %v135
    %v880 = vmul.f32 %v875, %v139
    %v881 = vadd.f32 %v877, %v152
    %v882 = vadd.f32 %v878, %v156
    %v883 = vadd.f32 %v879, %v160
    %v884 = vadd.f32 %v880, %v164
    %885 = vmatprep.subr.mxu0 %v112
    %886 = vmatpush1.msra.mxu0 %v111
    %887 = vmatprep.subr.mxu0 %v108
    %888 = vmatpush1.msra.mxu0 %v107
    %889 = vmatprep.subr.mxu0 %v104
    %890 = vmatpush1.msra.mxu0 %v103
    %891 = vmatprep.subr.mxu0 %v100
    %892 = vmatpush1.msra.mxu0 %v99
    %893 = vmatprep.subr.mxu0 %v96
    %894 = vmatpush1.msra.mxu0 %v95
    %895 = vmatprep.subr.mxu0 %v92
    %896 = vmatpush1.msra.mxu0 %v91
    %897 = vmatprep.subr.mxu0 %v88
    %898 = vmatpush1.msra.mxu0 %v87
    %899 = vmatprep.subr.mxu0 %v84
    %900 = vmatpush1.msra.mxu0 %v83
    %901 = vmatprep.subr.mxu0 %v80
    %902 = vmatpush1.msra.mxu0 %v79
    %903 = vmatprep.subr.mxu0 %v76
    %904 = vmatpush1.msra.mxu0 %v75
    %905 = vmatprep.subr.mxu0 %v72
    %906 = vmatpush1.msra.mxu0 %v71
    %907 = vmatprep.subr.mxu0 %v68
    %908 = vmatpush1.msra.mxu0 %v67
    %909 = vmatprep.subr.mxu0 %v64
    %910 = vmatpush1.msra.mxu0 %v63
    %911 = vmatprep.subr.mxu0 %v60
    %912 = vmatpush1.msra.mxu0 %v59
    %913 = vmatprep.subr.mxu0 %v56
    %914 = vmatpush1.msra.mxu0 %v55
    %915 = vmatprep.subr.mxu0 %v52
    %916 = vmatpush1.msra.mxu0 %v51
    %917 = vmatprep.subr.mxu0 0.0
    %918 = vmatpush2.msra.mxu0 0.0
    %919 = vmatprep.subr.mxu0 0.0
    %920 = vmatpush2.msra.mxu0 0.0
    %921 = vmatprep.subr.mxu0 0.0
    %922 = vmatpush2.msra.mxu0 0.0
    %923 = vmatprep.subr.mxu0 0.0
    %924 = vmatpush2.msra.mxu0 0.0
    %925 = vmatprep.subr.mxu0 0.0
    %926 = vmatpush2.msra.mxu0 0.0
    %927 = vmatprep.subr.mxu0 0.0
    %928 = vmatpush2.msra.mxu0 0.0
    %929 = vmatprep.subr.mxu0 0.0
    %930 = vmatpush2.msra.mxu0 0.0
    %931 = vmatprep.subr.mxu0 0.0
    %932 = vmatpush2.msra.mxu0 0.0
    %933 = vmatprep.subr.mxu0 0.0
    %934 = vmatpush2.msra.mxu0 0.0
    %935 = vmatprep.subr.mxu0 0.0
    %936 = vmatpush2.msra.mxu0 0.0
    %937 = vmatprep.subr.mxu0 0.0
    %938 = vmatpush2.msra.mxu0 0.0
    %939 = vmatprep.subr.mxu0 0.0
    %940 = vmatpush2.msra.mxu0 0.0
    %941 = vmatprep.subr.mxu0 0.0
    %942 = vmatpush2.msra.mxu0 0.0
    %943 = vmatprep.subr.mxu0 0.0
    %944 = vmatpush2.msra.mxu0 0.0
    %945 = vmatprep.subr.mxu0 0.0
    %946 = vmatpush2.msra.mxu0 0.0
    %947 = vmatprep.subr.mxu0 0.0
    %948 = vmatpush2.msra.mxu0 0.0
    %949 = vmatprep.mubr.f32.mxu0 0.0
    %950 = vmatmul.mubr.f32.gmra.mxu0 %v872
    %v951 = vpop.f32.mrf.mxu0
    %v952 = vadd.f32 %v881, %v951
    %v953 = vpop.f32.mrf.mxu0
    %v954 = vadd.f32 %v882, %v953
    %955 = vdwg.mxu0
    %956 = vmatprep.subr.mxu0 %v114
    %957 = vmatpush1.msra.mxu0 %v113
    %958 = vmatprep.subr.mxu0 %v110
    %959 = vmatpush1.msra.mxu0 %v109
    %960 = vmatprep.subr.mxu0 %v106
    %961 = vmatpush1.msra.mxu0 %v105
    %962 = vmatprep.subr.mxu0 %v102
    %963 = vmatpush1.msra.mxu0 %v101
    %964 = vmatprep.subr.mxu0 %v98
    %965 = vmatpush1.msra.mxu0 %v97
    %966 = vmatprep.subr.mxu0 %v94
    %967 = vmatpush1.msra.mxu0 %v93
    %968 = vmatprep.subr.mxu0 %v90
    %969 = vmatpush1.msra.mxu0 %v89
    %970 = vmatprep.subr.mxu0 %v86
    %971 = vmatpush1.msra.mxu0 %v85
    %972 = vmatprep.subr.mxu0 %v82
    %973 = vmatpush1.msra.mxu0 %v81
    %974 = vmatprep.subr.mxu0 %v78
    %975 = vmatpush1.msra.mxu0 %v77
    %976 = vmatprep.subr.mxu0 %v74
    %977 = vmatpush1.msra.mxu0 %v73
    %978 = vmatprep.subr.mxu0 %v70
    %979 = vmatpush1.msra.mxu0 %v69
    %980 = vmatprep.subr.mxu0 %v66
    %981 = vmatpush1.msra.mxu0 %v65
    %982 = vmatprep.subr.mxu0 %v62
    %983 = vmatpush1.msra.mxu0 %v61
    %984 = vmatprep.subr.mxu0 %v58
    %985 = vmatpush1.msra.mxu0 %v57
    %986 = vmatprep.subr.mxu0 %v54
    %987 = vmatpush1.msra.mxu0 %v53
    %988 = vmatprep.subr.mxu0 0.0
    %989 = vmatpush2.msra.mxu0 0.0
    %990 = vmatprep.subr.mxu0 0.0
    %991 = vmatpush2.msra.mxu0 0.0
    %992 = vmatprep.subr.mxu0 0.0
    %993 = vmatpush2.msra.mxu0 0.0
    %994 = vmatprep.subr.mxu0 0.0
    %995 = vmatpush2.msra.mxu0 0.0
    %996 = vmatprep.subr.mxu0 0.0
    %997 = vmatpush2.msra.mxu0 0.0
    %998 = vmatprep.subr.mxu0 0.0
    %999 = vmatpush2.msra.mxu0 0.0
    %1000 = vmatprep.subr.mxu0 0.0
    %1001 = vmatpush2.msra.mxu0 0.0
    %1002 = vmatprep.subr.mxu0 0.0
    %1003 = vmatpush2.msra.mxu0 0.0
    %1004 = vmatprep.subr.mxu0 0.0
    %1005 = vmatpush2.msra.mxu0 0.0
    %1006 = vmatprep.subr.mxu0 0.0
    %1007 = vmatpush2.msra.mxu0 0.0
    %1008 = vmatprep.subr.mxu0 0.0
    %1009 = vmatpush2.msra.mxu0 0.0
    %1010 = vmatprep.subr.mxu0 0.0
    %1011 = vmatpush2.msra.mxu0 0.0
    %1012 = vmatprep.subr.mxu0 0.0
    %1013 = vmatpush2.msra.mxu0 0.0
    %1014 = vmatprep.subr.mxu0 0.0
    %1015 = vmatpush2.msra.mxu0 0.0
    %1016 = vmatprep.subr.mxu0 0.0
    %1017 = vmatpush2.msra.mxu0 0.0
    %1018 = vmatprep.subr.mxu0 0.0
    %1019 = vmatpush2.msra.mxu0 0.0
    %1020 = vmatprep.mubr.f32.mxu0 0.0
    %1021 = vmatmul.mubr.f32.gmra.mxu0 %v872
    %v1022 = vpop.f32.mrf.mxu0
    %v1023 = vadd.f32 %v883, %v1022
    %v1024 = vpop.f32.mrf.mxu0
    %v1025 = vadd.f32 %v884, %v1024
    %1026 = vdwg.mxu0
    %v1027 = vxor.u32 %v952, 2147483648
    %v1028 = vxor.u32 %v954, 2147483648
    %v1029 = vxor.u32 %v1023, 2147483648
    %v1030 = vmul.f32 %v1027, 1.442695
    %v1031 = vpow.pop %v1030
    %v1032 = vmul.f32 %v1028, 1.442695
    %v1033 = vpow.pop %v1032
    %v1034 = vmul.f32 %v1029, 1.442695
    %v1035 = vpow.pop %v1034
    %v1036 = vadd.f32 %v1031, 1.0
    %v1037 = vadd.f32 %v1033, 1.0
    %v1038 = vadd.f32 %v1035, 1.0
    %v1039 = vrcp.pop %v1036
    %v1040 = vmul.f32 1.0, %v1039
    %v1041 = vrcp.pop %v1037
    %v1042 = vmul.f32 1.0, %v1041
    %v1043 = vrcp.pop %v1038
    %v1044 = vmul.f32 1.0, %v1043
    %v1045 = vtanh.pop %v1025
    %v1046 = vmul.f32 %v1042, %v870
    %v1047 = vmul.f32 %v1040, %v1045
    %v1048 = vadd.f32 %v1046, %v1047
    %v1049 = vtanh.pop %v1048
    %v1050 = vmul.f32 %v1044, %v1049
    %1051 = vset.pattern.permute.xlu0 5
    %1052 = vperm.xlu0 %1051, %v117
    %v1053 = vpop.permute.xlu0 %1052
    %v1055 = vmul.f32 %v1053, %v127
    %v1056 = vmul.f32 %v1053, %v131
    %v1057 = vmul.f32 %v1053, %v135
    %v1058 = vmul.f32 %v1053, %v139
    %v1059 = vadd.f32 %v1055, %v152
    %v1060 = vadd.f32 %v1056, %v156
    %v1061 = vadd.f32 %v1057, %v160
    %v1062 = vadd.f32 %v1058, %v164
    %1063 = vmatprep.subr.mxu0 %v112
    %1064 = vmatpush1.msra.mxu0 %v111
    %1065 = vmatprep.subr.mxu0 %v108
    %1066 = vmatpush1.msra.mxu0 %v107
    %1067 = vmatprep.subr.mxu0 %v104
    %1068 = vmatpush1.msra.mxu0 %v103
    %1069 = vmatprep.subr.mxu0 %v100
    %1070 = vmatpush1.msra.mxu0 %v99
    %1071 = vmatprep.subr.mxu0 %v96
    %1072 = vmatpush1.msra.mxu0 %v95
    %1073 = vmatprep.subr.mxu0 %v92
    %1074 = vmatpush1.msra.mxu0 %v91
    %1075 = vmatprep.subr.mxu0 %v88
    %1076 = vmatpush1.msra.mxu0 %v87
    %1077 = vmatprep.subr.mxu0 %v84
    %1078 = vmatpush1.msra.mxu0 %v83
    %1079 = vmatprep.subr.mxu0 %v80
    %1080 = vmatpush1.msra.mxu0 %v79
    %1081 = vmatprep.subr.mxu0 %v76
    %1082 = vmatpush1.msra.mxu0 %v75
    %1083 = vmatprep.subr.mxu0 %v72
    %1084 = vmatpush1.msra.mxu0 %v71
    %1085 = vmatprep.subr.mxu0 %v68
    %1086 = vmatpush1.msra.mxu0 %v67
    %1087 = vmatprep.subr.mxu0 %v64
    %1088 = vmatpush1.msra.mxu0 %v63
    %1089 = vmatprep.subr.mxu0 %v60
    %1090 = vmatpush1.msra.mxu0 %v59
    %1091 = vmatprep.subr.mxu0 %v56
    %1092 = vmatpush1.msra.mxu0 %v55
    %1093 = vmatprep.subr.mxu0 %v52
    %1094 = vmatpush1.msra.mxu0 %v51
    %1095 = vmatprep.subr.mxu0 0.0
    %1096 = vmatpush2.msra.mxu0 0.0
    %1097 = vmatprep.subr.mxu0 0.0
    %1098 = vmatpush2.msra.mxu0 0.0
    %1099 = vmatprep.subr.mxu0 0.0
    %1100 = vmatpush2.msra.mxu0 0.0
    %1101 = vmatprep.subr.mxu0 0.0
    %1102 = vmatpush2.msra.mxu0 0.0
    %1103 = vmatprep.subr.mxu0 0.0
    %1104 = vmatpush2.msra.mxu0 0.0
    %1105 = vmatprep.subr.mxu0 0.0
    %1106 = vmatpush2.msra.mxu0 0.0
    %1107 = vmatprep.subr.mxu0 0.0
    %1108 = vmatpush2.msra.mxu0 0.0
    %1109 = vmatprep.subr.mxu0 0.0
    %1110 = vmatpush2.msra.mxu0 0.0
    %1111 = vmatprep.subr.mxu0 0.0
    %1112 = vmatpush2.msra.mxu0 0.0
    %1113 = vmatprep.subr.mxu0 0.0
    %1114 = vmatpush2.msra.mxu0 0.0
    %1115 = vmatprep.subr.mxu0 0.0
    %1116 = vmatpush2.msra.mxu0 0.0
    %1117 = vmatprep.subr.mxu0 0.0
    %1118 = vmatpush2.msra.mxu0 0.0
    %1119 = vmatprep.subr.mxu0 0.0
    %1120 = vmatpush2.msra.mxu0 0.0
    %1121 = vmatprep.subr.mxu0 0.0
    %1122 = vmatpush2.msra.mxu0 0.0
    %1123 = vmatprep.subr.mxu0 0.0
    %1124 = vmatpush2.msra.mxu0 0.0
    %1125 = vmatprep.subr.mxu0 0.0
    %1126 = vmatpush2.msra.mxu0 0.0
    %1127 = vmatprep.mubr.f32.mxu0 0.0
    %1128 = vmatmul.mubr.f32.gmra.mxu0 %v1050
    %v1129 = vpop.f32.mrf.mxu0
    %v1130 = vadd.f32 %v1059, %v1129
    %v1131 = vpop.f32.mrf.mxu0
    %v1132 = vadd.f32 %v1060, %v1131
    %1133 = vdwg.mxu0
    %1134 = vmatprep.subr.mxu0 %v114
    %1135 = vmatpush1.msra.mxu0 %v113
    %1136 = vmatprep.subr.mxu0 %v110
    %1137 = vmatpush1.msra.mxu0 %v109
    %1138 = vmatprep.subr.mxu0 %v106
    %1139 = vmatpush1.msra.mxu0 %v105
    %1140 = vmatprep.subr.mxu0 %v102
    %1141 = vmatpush1.msra.mxu0 %v101
    %1142 = vmatprep.subr.mxu0 %v98
    %1143 = vmatpush1.msra.mxu0 %v97
    %1144 = vmatprep.subr.mxu0 %v94
    %1145 = vmatpush1.msra.mxu0 %v93
    %1146 = vmatprep.subr.mxu0 %v90
    %1147 = vmatpush1.msra.mxu0 %v89
    %1148 = vmatprep.subr.mxu0 %v86
    %1149 = vmatpush1.msra.mxu0 %v85
    %1150 = vmatprep.subr.mxu0 %v82
    %1151 = vmatpush1.msra.mxu0 %v81
    %1152 = vmatprep.subr.mxu0 %v78
    %1153 = vmatpush1.msra.mxu0 %v77
    %1154 = vmatprep.subr.mxu0 %v74
    %1155 = vmatpush1.msra.mxu0 %v73
    %1156 = vmatprep.subr.mxu0 %v70
    %1157 = vmatpush1.msra.mxu0 %v69
    %1158 = vmatprep.subr.mxu0 %v66
    %1159 = vmatpush1.msra.mxu0 %v65
    %1160 = vmatprep.subr.mxu0 %v62
    %1161 = vmatpush1.msra.mxu0 %v61
    %1162 = vmatprep.subr.mxu0 %v58
    %1163 = vmatpush1.msra.mxu0 %v57
    %1164 = vmatprep.subr.mxu0 %v54
    %1165 = vmatpush1.msra.mxu0 %v53
    %1166 = vmatprep.subr.mxu0 0.0
    %1167 = vmatpush2.msra.mxu0 0.0
    %1168 = vmatprep.subr.mxu0 0.0
    %1169 = vmatpush2.msra.mxu0 0.0
    %1170 = vmatprep.subr.mxu0 0.0
    %1171 = vmatpush2.msra.mxu0 0.0
    %1172 = vmatprep.subr.mxu0 0.0
    %1173 = vmatpush2.msra.mxu0 0.0
    %1174 = vmatprep.subr.mxu0 0.0
    %1175 = vmatpush2.msra.mxu0 0.0
    %1176 = vmatprep.subr.mxu0 0.0
    %1177 = vmatpush2.msra.mxu0 0.0
    %1178 = vmatprep.subr.mxu0 0.0
    %1179 = vmatpush2.msra.mxu0 0.0
    %1180 = vmatprep.subr.mxu0 0.0
    %1181 = vmatpush2.msra.mxu0 0.0
    %1182 = vmatprep.subr.mxu0 0.0
    %1183 = vmatpush2.msra.mxu0 0.0
    %1184 = vmatprep.subr.mxu0 0.0
    %1185 = vmatpush2.msra.mxu0 0.0
    %1186 = vmatprep.subr.mxu0 0.0
    %1187 = vmatpush2.msra.mxu0 0.0
    %1188 = vmatprep.subr.mxu0 0.0
    %1189 = vmatpush2.msra.mxu0 0.0
    %1190 = vmatprep.subr.mxu0 0.0
    %1191 = vmatpush2.msra.mxu0 0.0
    %1192 = vmatprep.subr.mxu0 0.0
    %1193 = vmatpush2.msra.mxu0 0.0
    %1194 = vmatprep.subr.mxu0 0.0
    %1195 = vmatpush2.msra.mxu0 0.0
    %1196 = vmatprep.subr.mxu0 0.0
    %1197 = vmatpush2.msra.mxu0 0.0
    %1198 = vmatprep.mubr.f32.mxu0 0.0
    %1199 = vmatmul.mubr.f32.gmra.mxu0 %v1050
    %v1200 = vpop.f32.mrf.mxu0
    %v1201 = vadd.f32 %v1061, %v1200
    %v1202 = vpop.f32.mrf.mxu0
    %v1203 = vadd.f32 %v1062, %v1202
    %1204 = vdwg.mxu0
    %v1205 = vxor.u32 %v1130, 2147483648
    %v1206 = vxor.u32 %v1132, 2147483648
    %v1207 = vxor.u32 %v1201, 2147483648
    %v1208 = vmul.f32 %v1205, 1.442695
    %v1209 = vpow.pop %v1208
    %v1210 = vmul.f32 %v1206, 1.442695
    %v1211 = vpow.pop %v1210
    %v1212 = vmul.f32 %v1207, 1.442695
    %v1213 = vpow.pop %v1212
    %v1214 = vadd.f32 %v1209, 1.0
    %v1215 = vadd.f32 %v1211, 1.0
    %v1216 = vadd.f32 %v1213, 1.0
    %v1217 = vrcp.pop %v1214
    %v1218 = vmul.f32 1.0, %v1217
    %v1219 = vrcp.pop %v1215
    %v1220 = vmul.f32 1.0, %v1219
    %v1221 = vrcp.pop %v1216
    %v1222 = vmul.f32 1.0, %v1221
    %v1223 = vtanh.pop %v1203
    %v1224 = vmul.f32 %v1220, %v1048
    %v1225 = vmul.f32 %v1218, %v1223
    %v1226 = vadd.f32 %v1224, %v1225
    %v1227 = vtanh.pop %v1226
    %v1228 = vmul.f32 %v1222, %v1227
    %1229 = vset.pattern.permute.xlu0 6
    %1230 = vperm.xlu0 %1229, %v117
    %v1231 = vpop.permute.xlu0 %1230
    %v1233 = vmul.f32 %v1231, %v127
    %v1234 = vmul.f32 %v1231, %v131
    %v1235 = vmul.f32 %v1231, %v135
    %v1236 = vmul.f32 %v1231, %v139
    %v1237 = vadd.f32 %v1233, %v152
    %v1238 = vadd.f32 %v1234, %v156
    %v1239 = vadd.f32 %v1235, %v160
    %v1240 = vadd.f32 %v1236, %v164
    %1241 = vmatprep.subr.mxu0 %v112
    %1242 = vmatpush1.msra.mxu0 %v111
    %1243 = vmatprep.subr.mxu0 %v108
    %1244 = vmatpush1.msra.mxu0 %v107
    %1245 = vmatprep.subr.mxu0 %v104
    %1246 = vmatpush1.msra.mxu0 %v103
    %1247 = vmatprep.subr.mxu0 %v100
    %1248 = vmatpush1.msra.mxu0 %v99
    %1249 = vmatprep.subr.mxu0 %v96
    %1250 = vmatpush1.msra.mxu0 %v95
    %1251 = vmatprep.subr.mxu0 %v92
    %1252 = vmatpush1.msra.mxu0 %v91
    %1253 = vmatprep.subr.mxu0 %v88
    %1254 = vmatpush1.msra.mxu0 %v87
    %1255 = vmatprep.subr.mxu0 %v84
    %1256 = vmatpush1.msra.mxu0 %v83
    %1257 = vmatprep.subr.mxu0 %v80
    %1258 = vmatpush1.msra.mxu0 %v79
    %1259 = vmatprep.subr.mxu0 %v76
    %1260 = vmatpush1.msra.mxu0 %v75
    %1261 = vmatprep.subr.mxu0 %v72
    %1262 = vmatpush1.msra.mxu0 %v71
    %1263 = vmatprep.subr.mxu0 %v68
    %1264 = vmatpush1.msra.mxu0 %v67
    %1265 = vmatprep.subr.mxu0 %v64
    %1266 = vmatpush1.msra.mxu0 %v63
    %1267 = vmatprep.subr.mxu0 %v60
    %1268 = vmatpush1.msra.mxu0 %v59
    %1269 = vmatprep.subr.mxu0 %v56
    %1270 = vmatpush1.msra.mxu0 %v55
    %1271 = vmatprep.subr.mxu0 %v52
    %1272 = vmatpush1.msra.mxu0 %v51
    %1273 = vmatprep.subr.mxu0 0.0
    %1274 = vmatpush2.msra.mxu0 0.0
    %1275 = vmatprep.subr.mxu0 0.0
    %1276 = vmatpush2.msra.mxu0 0.0
    %1277 = vmatprep.subr.mxu0 0.0
    %1278 = vmatpush2.msra.mxu0 0.0
    %1279 = vmatprep.subr.mxu0 0.0
    %1280 = vmatpush2.msra.mxu0 0.0
    %1281 = vmatprep.subr.mxu0 0.0
    %1282 = vmatpush2.msra.mxu0 0.0
    %1283 = vmatprep.subr.mxu0 0.0
    %1284 = vmatpush2.msra.mxu0 0.0
    %1285 = vmatprep.subr.mxu0 0.0
    %1286 = vmatpush2.msra.mxu0 0.0
    %1287 = vmatprep.subr.mxu0 0.0
    %1288 = vmatpush2.msra.mxu0 0.0
    %1289 = vmatprep.subr.mxu0 0.0
    %1290 = vmatpush2.msra.mxu0 0.0
    %1291 = vmatprep.subr.mxu0 0.0
    %1292 = vmatpush2.msra.mxu0 0.0
    %1293 = vmatprep.subr.mxu0 0.0
    %1294 = vmatpush2.msra.mxu0 0.0
    %1295 = vmatprep.subr.mxu0 0.0
    %1296 = vmatpush2.msra.mxu0 0.0
    %1297 = vmatprep.subr.mxu0 0.0
    %1298 = vmatpush2.msra.mxu0 0.0
    %1299 = vmatprep.subr.mxu0 0.0
    %1300 = vmatpush2.msra.mxu0 0.0
    %1301 = vmatprep.subr.mxu0 0.0
    %1302 = vmatpush2.msra.mxu0 0.0
    %1303 = vmatprep.subr.mxu0 0.0
    %1304 = vmatpush2.msra.mxu0 0.0
    %1305 = vmatprep.mubr.f32.mxu0 0.0
    %1306 = vmatmul.mubr.f32.gmra.mxu0 %v1228
    %v1307 = vpop.f32.mrf.mxu0
    %v1308 = vadd.f32 %v1237, %v1307
    %v1309 = vpop.f32.mrf.mxu0
    %v1310 = vadd.f32 %v1238, %v1309
    %1311 = vdwg.mxu0
    %1312 = vmatprep.subr.mxu0 %v114
    %1313 = vmatpush1.msra.mxu0 %v113
    %1314 = vmatprep.subr.mxu0 %v110
    %1315 = vmatpush1.msra.mxu0 %v109
    %1316 = vmatprep.subr.mxu0 %v106
    %1317 = vmatpush1.msra.mxu0 %v105
    %1318 = vmatprep.subr.mxu0 %v102
    %1319 = vmatpush1.msra.mxu0 %v101
    %1320 = vmatprep.subr.mxu0 %v98
    %1321 = vmatpush1.msra.mxu0 %v97
    %1322 = vmatprep.subr.mxu0 %v94
    %1323 = vmatpush1.msra.mxu0 %v93
    %1324 = vmatprep.subr.mxu0 %v90
    %1325 = vmatpush1.msra.mxu0 %v89
    %1326 = vmatprep.subr.mxu0 %v86
    %1327 = vmatpush1.msra.mxu0 %v85
    %1328 = vmatprep.subr.mxu0 %v82
    %1329 = vmatpush1.msra.mxu0 %v81
    %1330 = vmatprep.subr.mxu0 %v78
    %1331 = vmatpush1.msra.mxu0 %v77
    %1332 = vmatprep.subr.mxu0 %v74
    %1333 = vmatpush1.msra.mxu0 %v73
    %1334 = vmatprep.subr.mxu0 %v70
    %1335 = vmatpush1.msra.mxu0 %v69
    %1336 = vmatprep.subr.mxu0 %v66
    %1337 = vmatpush1.msra.mxu0 %v65
    %1338 = vmatprep.subr.mxu0 %v62
    %1339 = vmatpush1.msra.mxu0 %v61
    %1340 = vmatprep.subr.mxu0 %v58
    %1341 = vmatpush1.msra.mxu0 %v57
    %1342 = vmatprep.subr.mxu0 %v54
    %1343 = vmatpush1.msra.mxu0 %v53
    %1344 = vmatprep.subr.mxu0 0.0
    %1345 = vmatpush2.msra.mxu0 0.0
    %1346 = vmatprep.subr.mxu0 0.0
    %1347 = vmatpush2.msra.mxu0 0.0
    %1348 = vmatprep.subr.mxu0 0.0
    %1349 = vmatpush2.msra.mxu0 0.0
    %1350 = vmatprep.subr.mxu0 0.0
    %1351 = vmatpush2.msra.mxu0 0.0
    %1352 = vmatprep.subr.mxu0 0.0
    %1353 = vmatpush2.msra.mxu0 0.0
    %1354 = vmatprep.subr.mxu0 0.0
    %1355 = vmatpush2.msra.mxu0 0.0
    %1356 = vmatprep.subr.mxu0 0.0
    %1357 = vmatpush2.msra.mxu0 0.0
    %1358 = vmatprep.subr.mxu0 0.0
    %1359 = vmatpush2.msra.mxu0 0.0
    %1360 = vmatprep.subr.mxu0 0.0
    %1361 = vmatpush2.msra.mxu0 0.0
    %1362 = vmatprep.subr.mxu0 0.0
    %1363 = vmatpush2.msra.mxu0 0.0
    %1364 = vmatprep.subr.mxu0 0.0
    %1365 = vmatpush2.msra.mxu0 0.0
    %1366 = vmatprep.subr.mxu0 0.0
    %1367 = vmatpush2.msra.mxu0 0.0
    %1368 = vmatprep.subr.mxu0 0.0
    %1369 = vmatpush2.msra.mxu0 0.0
    %1370 = vmatprep.subr.mxu0 0.0
    %1371 = vmatpush2.msra.mxu0 0.0
    %1372 = vmatprep.subr.mxu0 0.0
    %1373 = vmatpush2.msra.mxu0 0.0
    %1374 = vmatprep.subr.mxu0 0.0
    %1375 = vmatpush2.msra.mxu0 0.0
    %1376 = vmatprep.mubr.f32.mxu0 0.0
    %1377 = vmatmul.mubr.f32.gmra.mxu0 %v1228
    %v1378 = vpop.f32.mrf.mxu0
    %v1379 = vadd.f32 %v1239, %v1378
    %v1380 = vpop.f32.mrf.mxu0
    %v1381 = vadd.f32 %v1240, %v1380
    %1382 = vdwg.mxu0
    %v1383 = vxor.u32 %v1308, 2147483648
    %v1384 = vxor.u32 %v1310, 2147483648
    %v1385 = vxor.u32 %v1379, 2147483648
    %v1386 = vmul.f32 %v1383, 1.442695
    %v1387 = vpow.pop %v1386
    %v1388 = vmul.f32 %v1384, 1.442695
    %v1389 = vpow.pop %v1388
    %v1390 = vmul.f32 %v1385, 1.442695
    %v1391 = vpow.pop %v1390
    %v1392 = vadd.f32 %v1387, 1.0
    %v1393 = vadd.f32 %v1389, 1.0
    %v1394 = vadd.f32 %v1391, 1.0
    %v1395 = vrcp.pop %v1392
    %v1396 = vmul.f32 1.0, %v1395
    %v1397 = vrcp.pop %v1393
    %v1398 = vmul.f32 1.0, %v1397
    %v1399 = vrcp.pop %v1394
    %v1400 = vmul.f32 1.0, %v1399
    %v1401 = vtanh.pop %v1381
    %v1402 = vmul.f32 %v1398, %v1226
    %v1403 = vmul.f32 %v1396, %v1401
    %v1404 = vadd.f32 %v1402, %v1403
    %v1405 = vtanh.pop %v1404
    %v1406 = vmul.f32 %v1400, %v1405
    %1407 = vset.pattern.permute.xlu0 7
    %1408 = vperm.xlu0 %1407, %v117
    %v1409 = vpop.permute.xlu0 %1408
    %v1411 = vmul.f32 %v1409, %v127
    %v1412 = vmul.f32 %v1409, %v131
    %v1413 = vmul.f32 %v1409, %v135
    %v1414 = vmul.f32 %v1409, %v139
    %v1415 = vadd.f32 %v1411, %v152
    %v1416 = vadd.f32 %v1412, %v156
    %v1417 = vadd.f32 %v1413, %v160
    %v1418 = vadd.f32 %v1414, %v164
    %1419 = vmatprep.subr.mxu0 %v112
    %1420 = vmatpush1.msra.mxu0 %v111
    %1421 = vmatprep.subr.mxu0 %v108
    %1422 = vmatpush1.msra.mxu0 %v107
    %1423 = vmatprep.subr.mxu0 %v104
    %1424 = vmatpush1.msra.mxu0 %v103
    %1425 = vmatprep.subr.mxu0 %v100
    %1426 = vmatpush1.msra.mxu0 %v99
    %1427 = vmatprep.subr.mxu0 %v96
    %1428 = vmatpush1.msra.mxu0 %v95
    %1429 = vmatprep.subr.mxu0 %v92
    %1430 = vmatpush1.msra.mxu0 %v91
    %1431 = vmatprep.subr.mxu0 %v88
    %1432 = vmatpush1.msra.mxu0 %v87
    %1433 = vmatprep.subr.mxu0 %v84
    %1434 = vmatpush1.msra.mxu0 %v83
    %1435 = vmatprep.subr.mxu0 %v80
    %1436 = vmatpush1.msra.mxu0 %v79
    %1437 = vmatprep.subr.mxu0 %v76
    %1438 = vmatpush1.msra.mxu0 %v75
    %1439 = vmatprep.subr.mxu0 %v72
    %1440 = vmatpush1.msra.mxu0 %v71
    %1441 = vmatprep.subr.mxu0 %v68
    %1442 = vmatpush1.msra.mxu0 %v67
    %1443 = vmatprep.subr.mxu0 %v64
    %1444 = vmatpush1.msra.mxu0 %v63
    %1445 = vmatprep.subr.mxu0 %v60
    %1446 = vmatpush1.msra.mxu0 %v59
    %1447 = vmatprep.subr.mxu0 %v56
    %1448 = vmatpush1.msra.mxu0 %v55
    %1449 = vmatprep.subr.mxu0 %v52
    %1450 = vmatpush1.msra.mxu0 %v51
    %1451 = vmatprep.subr.mxu0 0.0
    %1452 = vmatpush2.msra.mxu0 0.0
    %1453 = vmatprep.subr.mxu0 0.0
    %1454 = vmatpush2.msra.mxu0 0.0
    %1455 = vmatprep.subr.mxu0 0.0
    %1456 = vmatpush2.msra.mxu0 0.0
    %1457 = vmatprep.subr.mxu0 0.0
    %1458 = vmatpush2.msra.mxu0 0.0
    %1459 = vmatprep.subr.mxu0 0.0
    %1460 = vmatpush2.msra.mxu0 0.0
    %1461 = vmatprep.subr.mxu0 0.0
    %1462 = vmatpush2.msra.mxu0 0.0
    %1463 = vmatprep.subr.mxu0 0.0
    %1464 = vmatpush2.msra.mxu0 0.0
    %1465 = vmatprep.subr.mxu0 0.0
    %1466 = vmatpush2.msra.mxu0 0.0
    %1467 = vmatprep.subr.mxu0 0.0
    %1468 = vmatpush2.msra.mxu0 0.0
    %1469 = vmatprep.subr.mxu0 0.0
    %1470 = vmatpush2.msra.mxu0 0.0
    %1471 = vmatprep.subr.mxu0 0.0
    %1472 = vmatpush2.msra.mxu0 0.0
    %1473 = vmatprep.subr.mxu0 0.0
    %1474 = vmatpush2.msra.mxu0 0.0
    %1475 = vmatprep.subr.mxu0 0.0
    %1476 = vmatpush2.msra.mxu0 0.0
    %1477 = vmatprep.subr.mxu0 0.0
    %1478 = vmatpush2.msra.mxu0 0.0
    %1479 = vmatprep.subr.mxu0 0.0
    %1480 = vmatpush2.msra.mxu0 0.0
    %1481 = vmatprep.subr.mxu0 0.0
    %1482 = vmatpush2.msra.mxu0 0.0
    %1483 = vmatprep.mubr.f32.mxu0 0.0
    %1484 = vmatmul.mubr.f32.gmra.mxu0 %v1406
    %v1485 = vpop.f32.mrf.mxu0
    %v1486 = vadd.f32 %v1415, %v1485
    %v1487 = vpop.f32.mrf.mxu0
    %v1488 = vadd.f32 %v1416, %v1487
    %1489 = vdwg.mxu0
    %1490 = vmatprep.subr.mxu0 %v114
    %1491 = vmatpush1.msra.mxu0 %v113
    %1492 = vmatprep.subr.mxu0 %v110
    %1493 = vmatpush1.msra.mxu0 %v109
    %1494 = vmatprep.subr.mxu0 %v106
    %1495 = vmatpush1.msra.mxu0 %v105
    %1496 = vmatprep.subr.mxu0 %v102
    %1497 = vmatpush1.msra.mxu0 %v101
    %1498 = vmatprep.subr.mxu0 %v98
    %1499 = vmatpush1.msra.mxu0 %v97
    %1500 = vmatprep.subr.mxu0 %v94
    %1501 = vmatpush1.msra.mxu0 %v93
    %1502 = vmatprep.subr.mxu0 %v90
    %1503 = vmatpush1.msra.mxu0 %v89
    %1504 = vmatprep.subr.mxu0 %v86
    %1505 = vmatpush1.msra.mxu0 %v85
    %1506 = vmatprep.subr.mxu0 %v82
    %1507 = vmatpush1.msra.mxu0 %v81
    %1508 = vmatprep.subr.mxu0 %v78
    %1509 = vmatpush1.msra.mxu0 %v77
    %1510 = vmatprep.subr.mxu0 %v74
    %1511 = vmatpush1.msra.mxu0 %v73
    %1512 = vmatprep.subr.mxu0 %v70
    %1513 = vmatpush1.msra.mxu0 %v69
    %1514 = vmatprep.subr.mxu0 %v66
    %1515 = vmatpush1.msra.mxu0 %v65
    %1516 = vmatprep.subr.mxu0 %v62
    %1517 = vmatpush1.msra.mxu0 %v61
    %1518 = vmatprep.subr.mxu0 %v58
    %1519 = vmatpush1.msra.mxu0 %v57
    %1520 = vmatprep.subr.mxu0 %v54
    %1521 = vmatpush1.msra.mxu0 %v53
    %1522 = vmatprep.subr.mxu0 0.0
    %1523 = vmatpush2.msra.mxu0 0.0
    %1524 = vmatprep.subr.mxu0 0.0
    %1525 = vmatpush2.msra.mxu0 0.0
    %1526 = vmatprep.subr.mxu0 0.0
    %1527 = vmatpush2.msra.mxu0 0.0
    %1528 = vmatprep.subr.mxu0 0.0
    %1529 = vmatpush2.msra.mxu0 0.0
    %1530 = vmatprep.subr.mxu0 0.0
    %1531 = vmatpush2.msra.mxu0 0.0
    %1532 = vmatprep.subr.mxu0 0.0
    %1533 = vmatpush2.msra.mxu0 0.0
    %1534 = vmatprep.subr.mxu0 0.0
    %1535 = vmatpush2.msra.mxu0 0.0
    %1536 = vmatprep.subr.mxu0 0.0
    %1537 = vmatpush2.msra.mxu0 0.0
    %1538 = vmatprep.subr.mxu0 0.0
    %1539 = vmatpush2.msra.mxu0 0.0
    %1540 = vmatprep.subr.mxu0 0.0
    %1541 = vmatpush2.msra.mxu0 0.0
    %1542 = vmatprep.subr.mxu0 0.0
    %1543 = vmatpush2.msra.mxu0 0.0
    %1544 = vmatprep.subr.mxu0 0.0
    %1545 = vmatpush2.msra.mxu0 0.0
    %1546 = vmatprep.subr.mxu0 0.0
    %1547 = vmatpush2.msra.mxu0 0.0
    %1548 = vmatprep.subr.mxu0 0.0
    %1549 = vmatpush2.msra.mxu0 0.0
    %1550 = vmatprep.subr.mxu0 0.0
    %1551 = vmatpush2.msra.mxu0 0.0
    %1552 = vmatprep.subr.mxu0 0.0
    %1553 = vmatpush2.msra.mxu0 0.0
    %1554 = vmatprep.mubr.f32.mxu0 0.0
    %1555 = vmatmul.mubr.f32.gmra.mxu0 %v1406
    %v1556 = vpop.f32.mrf.mxu0
    %v1557 = vadd.f32 %v1417, %v1556
    %v1558 = vpop.f32.mrf.mxu0
    %v1559 = vadd.f32 %v1418, %v1558
    %1560 = vdwg.mxu0
    %v1561 = vxor.u32 %v1486, 2147483648
    %v1562 = vxor.u32 %v1488, 2147483648
    %v1563 = vxor.u32 %v1557, 2147483648
    %v1564 = vmul.f32 %v1561, 1.442695
    %v1565 = vpow.pop %v1564
    %v1566 = vmul.f32 %v1562, 1.442695
    %v1567 = vpow.pop %v1566
    %v1568 = vmul.f32 %v1563, 1.442695
    %v1569 = vpow.pop %v1568
    %v1570 = vadd.f32 %v1565, 1.0
    %v1571 = vadd.f32 %v1567, 1.0
    %v1572 = vadd.f32 %v1569, 1.0
    %v1573 = vrcp.pop %v1570
    %v1574 = vmul.f32 1.0, %v1573
    %v1575 = vrcp.pop %v1571
    %v1576 = vmul.f32 1.0, %v1575
    %v1577 = vrcp.pop %v1572
    %v1578 = vmul.f32 1.0, %v1577
    %v1579 = vtanh.pop %v1559
    %v1580 = vmul.f32 %v1576, %v1404
    %v1581 = vmul.f32 %v1574, %v1579
    %v1582 = vadd.f32 %v1580, %v1581
    %v1583 = vtanh.pop %v1582
    %v1584 = vmul.f32 %v1578, %v1583
    %v1585 = vld [vmem:[#allocation4] sm:$0xff]
    %v1586 = vld [vmem:[#allocation4 + $0x8] sm:$0xff]
    %v1587 = vld [vmem:[#allocation4 + $0x10] sm:$0xff]
    %v1588 = vld [vmem:[#allocation4 + $0x18] sm:$0xff]
    %v1589 = vld [vmem:[#allocation4 + $0x20] sm:$0xff]
    %v1590 = vld [vmem:[#allocation4 + $0x28] sm:$0xff]
    %v1591 = vld [vmem:[#allocation4 + $0x30] sm:$0xff]
    %v1592 = vld [vmem:[#allocation4 + $0x38] sm:$0xff]
    %v1593 = vld [vmem:[#allocation4 + $0x40] sm:$0xff]
    %v1594 = vld [vmem:[#allocation4 + $0x48] sm:$0xff]
    %v1595 = vld [vmem:[#allocation4 + $0x50] sm:$0xff]
    %v1596 = vld [vmem:[#allocation4 + $0x58] sm:$0xff]
    %v1597 = vld [vmem:[#allocation4 + $0x60] sm:$0xff]
    %v1598 = vld [vmem:[#allocation4 + $0x68] sm:$0xff]
    %v1599 = vld [vmem:[#allocation4 + $0x70] sm:$0xff]
    %v1600 = vld [vmem:[#allocation4 + $0x78] sm:$0xff]
    %v1601 = vld [vmem:[%s5] sm:$0x1]
    %v1603 = vlaneseq
    %v1604 = vshrl.u32 %v1603, 7
    %v1605 = vsub.s32 0, %v1604
    %v1606 = vrot.slane %v1601, %v1605
    %1608 = vmatprep.subr.mxu0 0.0
    %1609 = vmatpush1.msra.mxu0 %v1600
    %1610 = vmatprep.subr.mxu0 0.0
    %1611 = vmatpush1.msra.mxu0 %v1599
    %1612 = vmatprep.subr.mxu0 0.0
    %1613 = vmatpush1.msra.mxu0 %v1598
    %1614 = vmatprep.subr.mxu0 0.0
    %1615 = vmatpush1.msra.mxu0 %v1597
    %1616 = vmatprep.subr.mxu0 0.0
    %1617 = vmatpush1.msra.mxu0 %v1596
    %1618 = vmatprep.subr.mxu0 0.0
    %1619 = vmatpush1.msra.mxu0 %v1595
    %1620 = vmatprep.subr.mxu0 0.0
    %1621 = vmatpush1.msra.mxu0 %v1594
    %1622 = vmatprep.subr.mxu0 0.0
    %1623 = vmatpush1.msra.mxu0 %v1593
    %1624 = vmatprep.subr.mxu0 0.0
    %1625 = vmatpush1.msra.mxu0 %v1592
    %1626 = vmatprep.subr.mxu0 0.0
    %1627 = vmatpush1.msra.mxu0 %v1591
    %1628 = vmatprep.subr.mxu0 0.0
    %1629 = vmatpush1.msra.mxu0 %v1590
    %1630 = vmatprep.subr.mxu0 0.0
    %1631 = vmatpush1.msra.mxu0 %v1589
    %1632 = vmatprep.subr.mxu0 0.0
    %1633 = vmatpush1.msra.mxu0 %v1588
    %1634 = vmatprep.subr.mxu0 0.0
    %1635 = vmatpush1.msra.mxu0 %v1587
    %1636 = vmatprep.subr.mxu0 0.0
    %1637 = vmatpush1.msra.mxu0 %v1586
    %1638 = vmatprep.subr.mxu0 0.0
    %1639 = vmatpush1.msra.mxu0 %v1585
    %1640 = vmatprep.subr.mxu0 0.0
    %1641 = vmatpush2.msra.mxu0 0.0
    %1642 = vmatprep.subr.mxu0 0.0
    %1643 = vmatpush2.msra.mxu0 0.0
    %1644 = vmatprep.subr.mxu0 0.0
    %1645 = vmatpush2.msra.mxu0 0.0
    %1646 = vmatprep.subr.mxu0 0.0
    %1647 = vmatpush2.msra.mxu0 0.0
    %1648 = vmatprep.subr.mxu0 0.0
    %1649 = vmatpush2.msra.mxu0 0.0
    %1650 = vmatprep.subr.mxu0 0.0
    %1651 = vmatpush2.msra.mxu0 0.0
    %1652 = vmatprep.subr.mxu0 0.0
    %1653 = vmatpush2.msra.mxu0 0.0
    %1654 = vmatprep.subr.mxu0 0.0
    %1655 = vmatpush2.msra.mxu0 0.0
    %1656 = vmatprep.subr.mxu0 0.0
    %1657 = vmatpush2.msra.mxu0 0.0
    %1658 = vmatprep.subr.mxu0 0.0
    %1659 = vmatpush2.msra.mxu0 0.0
    %1660 = vmatprep.subr.mxu0 0.0
    %1661 = vmatpush2.msra.mxu0 0.0
    %1662 = vmatprep.subr.mxu0 0.0
    %1663 = vmatpush2.msra.mxu0 0.0
    %1664 = vmatprep.subr.mxu0 0.0
    %1665 = vmatpush2.msra.mxu0 0.0
    %1666 = vmatprep.subr.mxu0 0.0
    %1667 = vmatpush2.msra.mxu0 0.0
    %1668 = vmatprep.subr.mxu0 0.0
    %1669 = vmatpush2.msra.mxu0 0.0
    %1670 = vmatprep.subr.mxu0 0.0
    %1671 = vmatpush2.msra.mxu0 0.0
    %1672 = vmatprep.mubr.f32.mxu0 0.0
    %1673 = vmatmul.mubr.f32.gmra.mxu0 %v1584
    %v1674 = vpop.f32.mrf.mxu0
    %v1675 = vadd.f32 %v1606, %v1674
    %v1676 = vpop.f32.mrf.mxu0
    %1677 = vdwg.mxu0
    %1678 = vst [vmem:[%s6] sm:$0xff] %v1675
    // Predicated region
    $region34: #{lstm_classifier_forward.1} parent=1 // pred_check
      _
    $region35: #{lstm_classifier_forward.1} parent=1 // pred_check_branch
      %1680 = sbr.rel (0) target = $region37
    $region36: #{lstm_classifier_forward.1} parent=1 // pred_region
      _
    $region37: #{lstm_classifier_forward.1} parent=1 // pred_fallthru
      _
    // Predicated region
    $region38: #{lstm_classifier_forward.1} parent=1 // pred_check
      _
    $region39: #{lstm_classifier_forward.1} parent=1 // pred_check_branch
      %1682 = sbr.rel (0) target = $region41
    $region40: #{lstm_classifier_forward.1} parent=1 // pred_region
      _
    $region41: #{lstm_classifier_forward.1} parent=1 // pred_fallthru
      _
    %1683 = vsyncpa [#allocation3], 1
    %1684 = vsyncpa [#allocation5], 1

</llo_original>
